<compile_context>
chip_gen: v5e
topology: v5e:2x2
jax: 0.10.0
libtpu: 0.0.40
codegen_flags: <defaults>
</compile_context>

<pallas_src>
import math
import functools

import numpy as np
import jax
import jax.numpy as jnp
from jax.experimental import pallas as pl
from jax.experimental.pallas import tpu as pltpu

# ----------------------------- model config -----------------------------
DIM = 32
N_LAYERS = 2
N_HEADS = 4
N_KV_HEADS = 2
VOCAB = 256                  # LLaDA asserts vocab_size == 256
MULTIPLE_OF = 16
NORM_EPS = 1e-5
HEAD_DIM = DIM // N_HEADS            # 8
N_REP = N_HEADS // N_KV_HEADS        # 2
Q_DIM = N_HEADS * HEAD_DIM           # 32
KV_DIM = N_KV_HEADS * HEAD_DIM       # 16
QK_DIM = Q_DIM + KV_DIM              # 48  (RoPE applies to q|k only)
QKV_DIM = Q_DIM + 2 * KV_DIM         # 64
HH = N_HEADS * N_HEADS               # 16  ((q-head, k-head) score lanes)
EXP = HH * HEAD_DIM                  # 128 (expanded q/k/v lanes)


def _ffn_hidden_dim(dim, multiple_of):
    hidden = 4 * dim
    hidden = int(2 * hidden / 3)
    return multiple_of * ((hidden + multiple_of - 1) // multiple_of)


HIDDEN_DIM = _ffn_hidden_dim(DIM, MULTIPLE_OF)   # 96

# row layout of the "w_rows" slab (lanes = DIM)
W2_ROW_OFF = VOCAB                                # tok_emb rows [0, 256)
NORM_ROW_OFF = VOCAB + N_LAYERS * HIDDEN_DIM      # 448
W_ROWS_TOTAL = NORM_ROW_OFF + 2 * N_LAYERS + 1    # 453
W_ROWS_PAD = ((W_ROWS_TOTAL + 7) // 8) * 8        # 456

# row layout of the "w_mats" slab (lanes = 256)
LAYER_MAT_ROWS = 3 * DIM                          # wqkv / wo / w13 (32 rows each)
OUT_ROW_OFF = N_LAYERS * LAYER_MAT_ROWS           # 192
W_MATS_ROWS = OUT_ROW_OFF + DIM                   # 224
W_MATS_LANES = 256


def _round_up(n, m):
    return ((n + m - 1) // m) * m


# --------------------- trace-time (numpy) constant builders ---------------------

def _const_layout(B, S):
    """Row offsets inside the single constant slab (lanes >= 128)."""
    BS = B * S
    off, r = {}, 0
    for name, rows in (("EQ", Q_DIM), ("EK", KV_DIM), ("EP", HH),
                       ("SumS", EXP), ("SumO", EXP), ("DSum", HH),
                       ("pswap", QK_DIM), ("rope", 2 * S),
                       ("perm", N_HEADS * BS)):
        off[name] = r
        r += _round_up(rows, 8)
    return off, r


def _np_head_consts():
    """0/1 expand / block-sum matrices for the per-token (Hq x Hk) attention."""
    eq = np.zeros((Q_DIM, EXP), np.float32)    # q -> expanded lanes
    ek = np.zeros((KV_DIM, EXP), np.float32)   # k/v -> expanded lanes (repeat_kv)
    ep = np.zeros((HH, EXP), np.float32)       # probs -> expanded lanes
    dsum = np.zeros((HH, DIM), np.float32)     # probs -> per-head denominator
    for h in range(N_HEADS):
        for g in range(N_HEADS):
            kv = g // N_REP
            for d in range(HEAD_DIM):
                col = (h * N_HEADS + g) * HEAD_DIM + d
                eq[h * HEAD_DIM + d, col] = 1.0
                ek[kv * HEAD_DIM + d, col] = 1.0
                ep[h * N_HEADS + g, col] = 1.0
                dsum[h * N_HEADS + g, h * HEAD_DIM + d] = 1.0
    return eq, ek, ep, dsum


def _np_pair_swap(n):
    """(n, n) 0/1 matrix with (x @ P)[:, c] = x[:, c ^ 1]."""
    m = np.zeros((n, n), np.float32)
    idx = np.arange(n)
    m[idx ^ 1, idx] = 1.0
    return m


def _np_rope_tables(S, theta=10000.0):
    """Interleaved RoPE cos/sin tables over the q|k columns, q pre-scaled by
       1/sqrt(head_dim) (applied exactly once)."""
    half = HEAD_DIM // 2
    freqs = 1.0 / theta ** (np.arange(0, HEAD_DIM, 2)[:half].astype(np.float64) / HEAD_DIM)
    t = np.arange(S, dtype=np.float64)
    fr = np.outer(t, freqs)
    cos, sin = np.cos(fr), np.sin(fr)
    cos2 = np.repeat(cos, 2, axis=1)                                  # [c0,c0,c1,c1,...]
    sin2 = np.stack([-sin, sin], axis=-1).reshape(S, HEAD_DIM)        # [-s0,+s0,...]
    scale = 1.0 / math.sqrt(HEAD_DIM)
    cos_t = np.concatenate([np.tile(cos2, (1, N_HEADS)) * scale,
                            np.tile(cos2, (1, N_KV_HEADS))], axis=1)  # (S, 48)
    sin_t = np.concatenate([np.tile(sin2, (1, N_HEADS)) * scale,
                            np.tile(sin2, (1, N_KV_HEADS))], axis=1)
    return cos_t.astype(np.float32), sin_t.astype(np.float32)


def _np_out_perm(B, S):
    """Stacked 0/1 row-gather matrices implementing
       out.transpose(1,2).contiguous().view(B, S, -1) of the reference."""
    BS = B * S
    p = np.zeros((N_HEADS * BS, N_HEADS * BS), np.float32)
    for m in range(N_HEADS):
        for b in range(B):
            for i in range(S):
                h = (i * N_HEADS + m) // S
                s = (i * N_HEADS + m) % S
                p[m * BS + b * S + i, h * BS + b * S + s] = 1.0
    return p


def _build_const_slab(B, S):
    off, rows = _const_layout(B, S)
    lanes = max(EXP, _round_up(N_HEADS * B * S, 128))
    slab = np.zeros((rows, lanes), np.float32)
    eq, ek, ep, dsum = _np_head_consts()
    slab[off["EQ"]:off["EQ"] + Q_DIM, :EXP] = eq
    slab[off["EK"]:off["EK"] + KV_DIM, :EXP] = ek
    slab[off["EP"]:off["EP"] + HH, :EXP] = ep
    slab[off["SumS"]:off["SumS"] + EXP, :HH] = ep.T
    slab[off["SumO"]:off["SumO"] + EXP, :Q_DIM] = eq.T
    slab[off["DSum"]:off["DSum"] + HH, :DIM] = dsum
    slab[off["pswap"]:off["pswap"] + QK_DIM, :QK_DIM] = _np_pair_swap(QK_DIM)
    cos_t, sin_t = _np_rope_tables(S)
    slab[off["rope"]:off["rope"] + S, :QK_DIM] = cos_t
    slab[off["rope"] + S:off["rope"] + 2 * S, :QK_DIM] = sin_t
    slab[off["perm"]:off["perm"] + N_HEADS * B * S, :N_HEADS * B * S] = _np_out_perm(B, S)
    return slab, off


# ------------------------------- fused kernel -------------------------------

def _llada_kernel(tok_ref, wmat_ref, wrow_ref, const_ref, logits_ref, *, B, S):
    f32 = jnp.float32
    BS = B * S
    off, _ = _const_layout(B, S)

    def rmsnorm(x, w):
        ms = jnp.mean(x * x, axis=-1, keepdims=True)
        return x * jax.lax.rsqrt(ms + NORM_EPS) * w

    # ---- constants / tables (loaded once, hoisted out of the layer loop) ----
    eq = const_ref[off["EQ"]:off["EQ"] + Q_DIM, 0:EXP]               # (32, 128)
    ek = const_ref[off["EK"]:off["EK"] + KV_DIM, 0:EXP]              # (16, 128)
    ep = const_ref[off["EP"]:off["EP"] + HH, 0:EXP]                  # (16, 128)
    sum_s = const_ref[off["SumS"]:off["SumS"] + EXP, 0:HH]           # (128, 16)
    sum_o = const_ref[off["SumO"]:off["SumO"] + EXP, 0:Q_DIM]        # (128, 32)
    dsum = const_ref[off["DSum"]:off["DSum"] + HH, 0:DIM]            # (16, 32)
    pswap = const_ref[off["pswap"]:off["pswap"] + QK_DIM, 0:QK_DIM]  # (48, 48)
    cos1 = const_ref[off["rope"]:off["rope"] + S, 0:QK_DIM]          # (S, 48)
    sin1 = const_ref[off["rope"] + S:off["rope"] + 2 * S, 0:QK_DIM]
    cosf = jnp.concatenate([cos1] * B, axis=0)                       # (BS, 48)
    sinf = jnp.concatenate([sin1] * B, axis=0)
    perm = [const_ref[off["perm"] + m * BS:off["perm"] + (m + 1) * BS,
                      0:N_HEADS * BS] for m in range(N_HEADS)]       # H x (BS, H*BS)

    # ---- byte embedding: one-hot (BS, 256) @ (256, DIM) on the MXU ----
    emb = wrow_ref[0:VOCAB, :]                                       # (256, 32)
    lane = jax.lax.broadcasted_iota(jnp.int32, (BS, VOCAB), 1)
    onehot = (tok_ref[...] == lane).astype(f32)                      # (BS, 256)
    h = jnp.dot(onehot, emb, preferred_element_type=f32)             # (BS, 32)

    for l in range(N_LAYERS):
        base = l * LAYER_MAT_ROWS
        wqkv = wmat_ref[base:base + DIM, 0:QKV_DIM]                          # (32, 64)
        wo = wmat_ref[base + DIM:base + 2 * DIM, 0:DIM]                      # (32, 32)
        w13 = wmat_ref[base + 2 * DIM:base + 3 * DIM, 0:2 * HIDDEN_DIM]      # (32, 192)
        w2 = wrow_ref[W2_ROW_OFF + l * HIDDEN_DIM:
                      W2_ROW_OFF + (l + 1) * HIDDEN_DIM, :]                  # (96, 32)
        attn_w = wrow_ref[NORM_ROW_OFF + 2 * l:NORM_ROW_OFF + 2 * l + 1, :]  # (1, 32)
        ffn_w = wrow_ref[NORM_ROW_OFF + 2 * l + 1:NORM_ROW_OFF + 2 * l + 2, :]

        # ---------------- attention ----------------
        xn = rmsnorm(h, attn_w)
        qkv = jnp.dot(xn, wqkv, preferred_element_type=f32)          # (BS, 64)
        qk = qkv[:, :QK_DIM]                                         # (BS, 48)
        v = qkv[:, QK_DIM:]                                          # (BS, 16)
        # interleaved RoPE on q|k (1/sqrt(head_dim) folded into the q columns)
        rot = qk * cosf + jnp.dot(qk, pswap, preferred_element_type=f32) * sinf
        q = rot[:, :Q_DIM]                                           # (BS, 32)
        k = rot[:, Q_DIM:]                                           # (BS, 16)

        # Reference semantics: scores are (B, S, Hq, Hk) -> attention over the
        # head axis, per token.  All 16 (h, g) dot-products, repeat_kv and the
        # weighted-V sum are done with constant 0/1 expand / block-sum matmuls.
        q_big = jnp.dot(q, eq, preferred_element_type=f32)           # (BS, 128)
        k_big = jnp.dot(k, ek, preferred_element_type=f32)           # (BS, 128)
        v_big = jnp.dot(v, ek, preferred_element_type=f32)           # (BS, 128)
        scores = jnp.dot(q_big * k_big, sum_s, preferred_element_type=f32)   # (BS, 16)
        scores = scores - jnp.max(scores, axis=-1, keepdims=True)    # exact shift
        p = jnp.exp(scores)                                          # (BS, 16)
        denom = jnp.dot(p, dsum, preferred_element_type=f32)         # (BS, 32) per-head
        p_big = jnp.dot(p, ep, preferred_element_type=f32)           # (BS, 128)
        o_raw = jnp.dot(p_big * v_big, sum_o, preferred_element_type=f32)    # (BS, 32)
        o = o_raw * pl.reciprocal(denom, approx=True)                # softmax normalise

        # transpose(1,2).contiguous().view(B, S, -1): constant row-gather matmuls
        o_stack = jnp.concatenate(
            [o[:, hh * HEAD_DIM:(hh + 1) * HEAD_DIM] for hh in range(N_HEADS)],
            axis=0)                                                  # (H*BS, Dh)
        y = jnp.concatenate(
            [jnp.dot(perm[m], o_stack, preferred_element_type=f32)
             for m in range(N_HEADS)], axis=-1)                      # (BS, 32)
        h = h + jnp.dot(y, wo, preferred_element_type=f32)

        # ---------------- feed-forward (SwiGLU) ----------------
        xn2 = rmsnorm(h, ffn_w)
        h13 = jnp.dot(xn2, w13, preferred_element_type=f32)          # (BS, 192)
        h1 = h13[:, :HIDDEN_DIM]
        h3 = h13[:, HIDDEN_DIM:]
        sig = pl.reciprocal(1.0 + jnp.exp(-h1), approx=True)         # silu via EUP
        h = h + jnp.dot(h1 * sig * h3, w2, preferred_element_type=f32)

    # -------- last-position rows first, then final norm + head matmul --------
    last = jnp.concatenate([h[(b + 1) * S - 1:(b + 1) * S, :] for b in range(B)],
                           axis=0)                                   # (B, 32)
    final_w = wrow_ref[NORM_ROW_OFF + 2 * N_LAYERS:NORM_ROW_OFF + 2 * N_LAYERS + 1, :]
    out_w = wmat_ref[OUT_ROW_OFF:OUT_ROW_OFF + DIM, 0:VOCAB]         # (32, 256)
    logits_ref[...] = jnp.dot(rmsnorm(last, final_w), out_w,
                              preferred_element_type=f32)            # (B, 256)


def _full_spec(a):
    return pl.BlockSpec(a.shape, lambda i, nd=a.ndim: (0,) * nd)


# --------------------------------- JAX glue ---------------------------------

def llada_forward(params, tokens):
    B, S = tokens.shape
    slab_np, _ = _build_const_slab(B, S)          # pure numpy -> trace-time constant
    const_slab = jnp.asarray(slab_np)
    tok2d = tokens.astype(jnp.int32).reshape(B * S, 1)
    args = (tok2d, params["w_mats"], params["w_rows"], const_slab)
    logits = pl.pallas_call(
        functools.partial(_llada_kernel, B=B, S=S),
        grid=(1,),
        in_specs=[_full_spec(a) for a in args],
        out_specs=pl.BlockSpec((B, VOCAB), lambda i: (0, 0)),
        out_shape=jax.ShapeDtypeStruct((B, VOCAB), jnp.float32),
        compiler_params=pltpu.CompilerParams(
            dimension_semantics=("arbitrary",),
            vmem_limit_bytes=32 * 1024 * 1024),    # total residency ~0.6 MiB
    )(*args)
    # targets=None inference path: logits only for the last position.
    return logits.reshape(B, 1, VOCAB)


# -------------------------------- parameters --------------------------------

def init_params(key):
    std = 0.02
    small_std = 0.02 / math.sqrt(2 * N_LAYERS)     # for w3.weight and wo.weight
    keys = jax.random.split(key, 2 + N_LAYERS)
    normal = jax.random.normal

    tok_emb = std * normal(keys[0], (VOCAB, DIM), jnp.float32)
    out_w = std * normal(keys[1], (VOCAB, DIM), jnp.float32)

    w_mats = jnp.zeros((W_MATS_ROWS, W_MATS_LANES), jnp.float32)
    w_rows = jnp.zeros((W_ROWS_PAD, DIM), jnp.float32)

    w_rows = w_rows.at[0:VOCAB, :].set(tok_emb)
    # RMSNorm weights initialise to ones (attn_norm_l, ffn_norm_l, ..., final norm)
    w_rows = w_rows.at[NORM_ROW_OFF:NORM_ROW_OFF + 2 * N_LAYERS + 1, :].set(1.0)

    for l in range(N_LAYERS):
        lk = jax.random.split(keys[2 + l], 7)
        wq = std * normal(lk[0], (Q_DIM, DIM), jnp.float32)
        wk = std * normal(lk[1], (KV_DIM, DIM), jnp.float32)
        wv = std * normal(lk[2], (KV_DIM, DIM), jnp.float32)
        wo = small_std * normal(lk[3], (DIM, Q_DIM), jnp.float32)
        w1 = std * normal(lk[4], (HIDDEN_DIM, DIM), jnp.float32)
        w2 = std * normal(lk[5], (DIM, HIDDEN_DIM), jnp.float32)
        w3 = small_std * normal(lk[6], (HIDDEN_DIM, DIM), jnp.float32)
        base = l * LAYER_MAT_ROWS
        w_mats = w_mats.at[base:base + DIM, 0:QKV_DIM].set(
            jnp.concatenate([wq.T, wk.T, wv.T], axis=1))             # (32, 64)
        w_mats = w_mats.at[base + DIM:base + 2 * DIM, 0:DIM].set(wo.T)
        w_mats = w_mats.at[base + 2 * DIM:base + 3 * DIM, 0:2 * HIDDEN_DIM].set(
            jnp.concatenate([w1.T, w3.T], axis=1))                   # (32, 192)
        w_rows = w_rows.at[W2_ROW_OFF + l * HIDDEN_DIM:
                           W2_ROW_OFF + (l + 1) * HIDDEN_DIM, :].set(w2.T)

    w_mats = w_mats.at[OUT_ROW_OFF:OUT_ROW_OFF + DIM, 0:VOCAB].set(out_w.T)
    return {"w_mats": w_mats, "w_rows": w_rows}


# ----------------------------------- main ------------------------------------

if __name__ == "__main__":
    key = jax.random.PRNGKey(0)
    pkey, tkey = jax.random.split(key)
    params = init_params(pkey)

    B, S = 2, 8
    tokens = jax.random.randint(tkey, (B, S), 0, VOCAB, dtype=jnp.int32)

    fwd = jax.jit(llada_forward)
    logits = fwd(params, tokens)
    jax.block_until_ready(logits)

    assert logits.shape == (B, 1, VOCAB), logits.shape
    assert bool(jnp.all(jnp.isfinite(logits)))
    print("KERNEL_OK")
</pallas_src>

<mosaic_0001>
module attributes {stable_mosaic.version = 11 : i64} {
  func.func @_llada_kernel(%arg0: i32, %arg1: memref<16x1xi32, #tpu.memory_space<vmem>>, %arg2: memref<224x256xf32, #tpu.memory_space<vmem>>, %arg3: memref<456x32xf32, #tpu.memory_space<vmem>>, %arg4: memref<464x128xf32, #tpu.memory_space<vmem>>, %arg5: memref<2x256xf32, #tpu.memory_space<vmem>>) attributes {dimension_semantics = [#tpu.dimension_semantics<arbitrary>], iteration_bounds = array<i64: 1>, scalar_prefetch = 0 : i64, scratch_operands = 0 : i64, tpu.core_type = #tpu.core_type<tc>, window_params = [{pipeline_mode = #tpu.pipeline_mode<synchronous>, transform_indices = @transform_0, window_bounds = array<i64: 16, 1>}, {pipeline_mode = #tpu.pipeline_mode<synchronous>, transform_indices = @transform_1, window_bounds = array<i64: 224, 256>}, {pipeline_mode = #tpu.pipeline_mode<synchronous>, transform_indices = @transform_2, window_bounds = array<i64: 456, 32>}, {pipeline_mode = #tpu.pipeline_mode<synchronous>, transform_indices = @transform_3, window_bounds = array<i64: 464, 128>}, {pipeline_mode = #tpu.pipeline_mode<synchronous>, transform_indices = @transform_4, window_bounds = array<i64: 2, 256>}]} {
    %c0 = arith.constant 0 : index
    %c0_0 = arith.constant 0 : index
    %0 = vector.load %arg4[%c0, %c0_0] : memref<464x128xf32, #tpu.memory_space<vmem>>, vector<32x128xf32>
    %c32 = arith.constant 32 : index
    %c0_1 = arith.constant 0 : index
    %1 = vector.load %arg4[%c32, %c0_1] : memref<464x128xf32, #tpu.memory_space<vmem>>, vector<16x128xf32>
    %c48 = arith.constant 48 : index
    %c0_2 = arith.constant 0 : index
    %2 = vector.load %arg4[%c48, %c0_2] : memref<464x128xf32, #tpu.memory_space<vmem>>, vector<16x128xf32>
    %c64 = arith.constant 64 : index
    %c0_3 = arith.constant 0 : index
    %3 = vector.load %arg4[%c64, %c0_3] : memref<464x128xf32, #tpu.memory_space<vmem>>, vector<128x16xf32>
    %c192 = arith.constant 192 : index
    %c0_4 = arith.constant 0 : index
    %4 = vector.load %arg4[%c192, %c0_4] : memref<464x128xf32, #tpu.memory_space<vmem>>, vector<128x32xf32>
    %c320 = arith.constant 320 : index
    %c0_5 = arith.constant 0 : index
    %5 = vector.load %arg4[%c320, %c0_5] : memref<464x128xf32, #tpu.memory_space<vmem>>, vector<16x32xf32>
    %c336 = arith.constant 336 : index
    %c0_6 = arith.constant 0 : index
    %6 = vector.load %arg4[%c336, %c0_6] : memref<464x128xf32, #tpu.memory_space<vmem>>, vector<48x48xf32>
    %c384 = arith.constant 384 : index
    %c0_7 = arith.constant 0 : index
    %7 = vector.load %arg4[%c384, %c0_7] : memref<464x128xf32, #tpu.memory_space<vmem>>, vector<8x48xf32>
    %c392 = arith.constant 392 : index
    %c0_8 = arith.constant 0 : index
    %8 = vector.load %arg4[%c392, %c0_8] : memref<464x128xf32, #tpu.memory_space<vmem>>, vector<8x48xf32>
    %9 = tpu.concatenate %7, %7 in 0 : vector<8x48xf32>, vector<8x48xf32> -> vector<16x48xf32>
    %10 = tpu.concatenate %8, %8 in 0 : vector<8x48xf32>, vector<8x48xf32> -> vector<16x48xf32>
    %c400 = arith.constant 400 : index
    %c0_9 = arith.constant 0 : index
    %11 = vector.load %arg4[%c400, %c0_9] : memref<464x128xf32, #tpu.memory_space<vmem>>, vector<16x64xf32>
    %c416 = arith.constant 416 : index
    %c0_10 = arith.constant 0 : index
    %12 = vector.load %arg4[%c416, %c0_10] : memref<464x128xf32, #tpu.memory_space<vmem>>, vector<16x64xf32>
    %c432 = arith.constant 432 : index
    %c0_11 = arith.constant 0 : index
    %13 = vector.load %arg4[%c432, %c0_11] : memref<464x128xf32, #tpu.memory_space<vmem>>, vector<16x64xf32>
    %c448 = arith.constant 448 : index
    %c0_12 = arith.constant 0 : index
    %14 = vector.load %arg4[%c448, %c0_12] : memref<464x128xf32, #tpu.memory_space<vmem>>, vector<16x64xf32>
    %c0_13 = arith.constant 0 : index
    %c0_14 = arith.constant 0 : index
    %15 = vector.load %arg3[%c0_13, %c0_14] : memref<456x32xf32, #tpu.memory_space<vmem>>, vector<256x32xf32>
    %16 = tpu.iota {dimensions = array<i32: 1>} : vector<16x256xi32>
    %c0_15 = arith.constant 0 : index
    %c0_16 = arith.constant 0 : index
    %17 = vector.load %arg1[%c0_15, %c0_16] : memref<16x1xi32, #tpu.memory_space<vmem>>, vector<16x1xi32>
    %18 = vector.broadcast %17 : vector<16x1xi32> to vector<16x256xi32>
    %19 = arith.cmpi eq, %18, %16 : vector<16x256xi32>
    %20 = arith.extui %19 : vector<16x256xi1> to vector<16x256xi32>
    %21 = arith.sitofp %20 : vector<16x256xi32> to vector<16x256xf32>
    %cst = arith.constant dense<0.000000e+00> : vector<16x32xf32>
    %22 = tpu.matmul %21, %15, %cst {dimension_numbers = #tpu.dot_dimension_numbers<[1], [0], [0], [1], [0, 0, 1, 1], [], []>} : vector<16x256xf32>, vector<256x32xf32>, vector<16x32xf32> -> vector<16x32xf32>
    %c0_17 = arith.constant 0 : index
    %c0_18 = arith.constant 0 : index
    %23 = vector.load %arg2[%c0_17, %c0_18] : memref<224x256xf32, #tpu.memory_space<vmem>>, vector<32x64xf32>
    %c32_19 = arith.constant 32 : index
    %c0_20 = arith.constant 0 : index
    %24 = vector.load %arg2[%c32_19, %c0_20] : memref<224x256xf32, #tpu.memory_space<vmem>>, vector<32x32xf32>
    %c64_21 = arith.constant 64 : index
    %c0_22 = arith.constant 0 : index
    %25 = vector.load %arg2[%c64_21, %c0_22] : memref<224x256xf32, #tpu.memory_space<vmem>>, vector<32x192xf32>
    %c256 = arith.constant 256 : index
    %c0_23 = arith.constant 0 : index
    %26 = vector.load %arg3[%c256, %c0_23] : memref<456x32xf32, #tpu.memory_space<vmem>>, vector<96x32xf32>
    %c448_24 = arith.constant 448 : index
    %c0_25 = arith.constant 0 : index
    %27 = vector.load %arg3[%c448_24, %c0_25] : memref<456x32xf32, #tpu.memory_space<vmem>>, vector<1x32xf32>
    %c449 = arith.constant 449 : index
    %c0_26 = arith.constant 0 : index
    %28 = vector.load %arg3[%c449, %c0_26] : memref<456x32xf32, #tpu.memory_space<vmem>>, vector<1x32xf32>
    %29 = arith.mulf %22, %22 : vector<16x32xf32>
    %cst_27 = arith.constant dense<0.000000e+00> : vector<16xf32>
    %30 = vector.multi_reduction <add>, %29, %cst_27 [1] : vector<16x32xf32> to vector<16xf32>
    %31 = vector.shape_cast %30 : vector<16xf32> to vector<16x1xf32>
    %cst_28 = arith.constant 3.200000e+01 : f32
    %32 = vector.broadcast %cst_28 : f32 to vector<16x1xf32>
    %33 = arith.divf %31, %32 : vector<16x1xf32>
    %cst_29 = arith.constant 9.99999974E-6 : f32
    %34 = vector.broadcast %cst_29 : f32 to vector<16x1xf32>
    %35 = arith.addf %33, %34 : vector<16x1xf32>
    %36 = math.rsqrt %35 : vector<16x1xf32>
    %37 = vector.broadcast %36 : vector<16x1xf32> to vector<16x32xf32>
    %38 = arith.mulf %22, %37 : vector<16x32xf32>
    %39 = vector.broadcast %27 : vector<1x32xf32> to vector<16x32xf32>
    %40 = arith.mulf %38, %39 : vector<16x32xf32>
    %cst_30 = arith.constant dense<0.000000e+00> : vector<16x64xf32>
    %41 = tpu.matmul %40, %23, %cst_30 {dimension_numbers = #tpu.dot_dimension_numbers<[1], [0], [0], [1], [0, 0, 1, 1], [], []>} : vector<16x32xf32>, vector<32x64xf32>, vector<16x64xf32> -> vector<16x64xf32>
    %42 = vector.extract_strided_slice %41 {offsets = [0, 0], sizes = [16, 48], strides = [1, 1]} : vector<16x64xf32> to vector<16x48xf32>
    %43 = vector.extract_strided_slice %41 {offsets = [0, 48], sizes = [16, 16], strides = [1, 1]} : vector<16x64xf32> to vector<16x16xf32>
    %44 = arith.mulf %42, %9 : vector<16x48xf32>
    %cst_31 = arith.constant dense<0.000000e+00> : vector<16x48xf32>
    %45 = tpu.matmul %42, %6, %cst_31 {dimension_numbers = #tpu.dot_dimension_numbers<[1], [0], [0], [1], [0, 0, 1, 1], [], []>} : vector<16x48xf32>, vector<48x48xf32>, vector<16x48xf32> -> vector<16x48xf32>
    %46 = arith.mulf %45, %10 : vector<16x48xf32>
    %47 = arith.addf %44, %46 : vector<16x48xf32>
    %48 = vector.extract_strided_slice %47 {offsets = [0, 0], sizes = [16, 32], strides = [1, 1]} : vector<16x48xf32> to vector<16x32xf32>
    %49 = vector.extract_strided_slice %47 {offsets = [0, 32], sizes = [16, 16], strides = [1, 1]} : vector<16x48xf32> to vector<16x16xf32>
    %cst_32 = arith.constant dense<0.000000e+00> : vector<16x128xf32>
    %50 = tpu.matmul %48, %0, %cst_32 {dimension_numbers = #tpu.dot_dimension_numbers<[1], [0], [0], [1], [0, 0, 1, 1], [], []>} : vector<16x32xf32>, vector<32x128xf32>, vector<16x128xf32> -> vector<16x128xf32>
    %cst_33 = arith.constant dense<0.000000e+00> : vector<16x128xf32>
    %51 = tpu.matmul %49, %1, %cst_33 {dimension_numbers = #tpu.dot_dimension_numbers<[1], [0], [0], [1], [0, 0, 1, 1], [], []>} : vector<16x16xf32>, vector<16x128xf32>, vector<16x128xf32> -> vector<16x128xf32>
    %cst_34 = arith.constant dense<0.000000e+00> : vector<16x128xf32>
    %52 = tpu.matmul %43, %1, %cst_34 {dimension_numbers = #tpu.dot_dimension_numbers<[1], [0], [0], [1], [0, 0, 1, 1], [], []>} : vector<16x16xf32>, vector<16x128xf32>, vector<16x128xf32> -> vector<16x128xf32>
    %53 = arith.mulf %50, %51 : vector<16x128xf32>
    %cst_35 = arith.constant dense<0.000000e+00> : vector<16x16xf32>
    %54 = tpu.matmul %53, %3, %cst_35 {dimension_numbers = #tpu.dot_dimension_numbers<[1], [0], [0], [1], [0, 0, 1, 1], [], []>} : vector<16x128xf32>, vector<128x16xf32>, vector<16x16xf32> -> vector<16x16xf32>
    %cst_36 = arith.constant dense<0xFF800000> : vector<16xf32>
    %55 = vector.multi_reduction <maximumf>, %54, %cst_36 [1] : vector<16x16xf32> to vector<16xf32>
    %56 = vector.shape_cast %55 : vector<16xf32> to vector<16x1xf32>
    %57 = vector.broadcast %56 : vector<16x1xf32> to vector<16x16xf32>
    %58 = arith.subf %54, %57 : vector<16x16xf32>
    %59 = math.exp %58 : vector<16x16xf32>
    %cst_37 = arith.constant dense<0.000000e+00> : vector<16x32xf32>
    %60 = tpu.matmul %59, %5, %cst_37 {dimension_numbers = #tpu.dot_dimension_numbers<[1], [0], [0], [1], [0, 0, 1, 1], [], []>} : vector<16x16xf32>, vector<16x32xf32>, vector<16x32xf32> -> vector<16x32xf32>
    %cst_38 = arith.constant dense<0.000000e+00> : vector<16x128xf32>
    %61 = tpu.matmul %59, %2, %cst_38 {dimension_numbers = #tpu.dot_dimension_numbers<[1], [0], [0], [1], [0, 0, 1, 1], [], []>} : vector<16x16xf32>, vector<16x128xf32>, vector<16x128xf32> -> vector<16x128xf32>
    %62 = arith.mulf %61, %52 : vector<16x128xf32>
    %cst_39 = arith.constant dense<0.000000e+00> : vector<16x32xf32>
    %63 = tpu.matmul %62, %4, %cst_39 {dimension_numbers = #tpu.dot_dimension_numbers<[1], [0], [0], [1], [0, 0, 1, 1], [], []>} : vector<16x128xf32>, vector<128x32xf32>, vector<16x32xf32> -> vector<16x32xf32>
    %64 = tpu.reciprocal %60 {approx = true} : vector<16x32xf32> -> vector<16x32xf32>
    %65 = arith.mulf %63, %64 : vector<16x32xf32>
    %66 = vector.extract_strided_slice %65 {offsets = [0, 0], sizes = [16, 8], strides = [1, 1]} : vector<16x32xf32> to vector<16x8xf32>
    %67 = vector.extract_strided_slice %65 {offsets = [0, 8], sizes = [16, 8], strides = [1, 1]} : vector<16x32xf32> to vector<16x8xf32>
    %68 = vector.extract_strided_slice %65 {offsets = [0, 16], sizes = [16, 8], strides = [1, 1]} : vector<16x32xf32> to vector<16x8xf32>
    %69 = vector.extract_strided_slice %65 {offsets = [0, 24], sizes = [16, 8], strides = [1, 1]} : vector<16x32xf32> to vector<16x8xf32>
    %70 = tpu.concatenate %66, %67, %68, %69 in 0 : vector<16x8xf32>, vector<16x8xf32>, vector<16x8xf32>, vector<16x8xf32> -> vector<64x8xf32>
    %cst_40 = arith.constant dense<0.000000e+00> : vector<16x8xf32>
    %71 = tpu.matmul %11, %70, %cst_40 {dimension_numbers = #tpu.dot_dimension_numbers<[1], [0], [0], [1], [0, 0, 1, 1], [], []>} : vector<16x64xf32>, vector<64x8xf32>, vector<16x8xf32> -> vector<16x8xf32>
    %cst_41 = arith.constant dense<0.000000e+00> : vector<16x8xf32>
    %72 = tpu.matmul %12, %70, %cst_41 {dimension_numbers = #tpu.dot_dimension_numbers<[1], [0], [0], [1], [0, 0, 1, 1], [], []>} : vector<16x64xf32>, vector<64x8xf32>, vector<16x8xf32> -> vector<16x8xf32>
    %cst_42 = arith.constant dense<0.000000e+00> : vector<16x8xf32>
    %73 = tpu.matmul %13, %70, %cst_42 {dimension_numbers = #tpu.dot_dimension_numbers<[1], [0], [0], [1], [0, 0, 1, 1], [], []>} : vector<16x64xf32>, vector<64x8xf32>, vector<16x8xf32> -> vector<16x8xf32>
    %cst_43 = arith.constant dense<0.000000e+00> : vector<16x8xf32>
    %74 = tpu.matmul %14, %70, %cst_43 {dimension_numbers = #tpu.dot_dimension_numbers<[1], [0], [0], [1], [0, 0, 1, 1], [], []>} : vector<16x64xf32>, vector<64x8xf32>, vector<16x8xf32> -> vector<16x8xf32>
    %75 = tpu.concatenate %71, %72, %73, %74 in 1 : vector<16x8xf32>, vector<16x8xf32>, vector<16x8xf32>, vector<16x8xf32> -> vector<16x32xf32>
    %cst_44 = arith.constant dense<0.000000e+00> : vector<16x32xf32>
    %76 = tpu.matmul %75, %24, %cst_44 {dimension_numbers = #tpu.dot_dimension_numbers<[1], [0], [0], [1], [0, 0, 1, 1], [], []>} : vector<16x32xf32>, vector<32x32xf32>, vector<16x32xf32> -> vector<16x32xf32>
    %77 = arith.addf %22, %76 : vector<16x32xf32>
    %78 = arith.mulf %77, %77 : vector<16x32xf32>
    %cst_45 = arith.constant dense<0.000000e+00> : vector<16xf32>
    %79 = vector.multi_reduction <add>, %78, %cst_45 [1] : vector<16x32xf32> to vector<16xf32>
    %80 = vector.shape_cast %79 : vector<16xf32> to vector<16x1xf32>
    %cst_46 = arith.constant 3.200000e+01 : f32
    %81 = vector.broadcast %cst_46 : f32 to vector<16x1xf32>
    %82 = arith.divf %80, %81 : vector<16x1xf32>
    %cst_47 = arith.constant 9.99999974E-6 : f32
    %83 = vector.broadcast %cst_47 : f32 to vector<16x1xf32>
    %84 = arith.addf %82, %83 : vector<16x1xf32>
    %85 = math.rsqrt %84 : vector<16x1xf32>
    %86 = vector.broadcast %85 : vector<16x1xf32> to vector<16x32xf32>
    %87 = arith.mulf %77, %86 : vector<16x32xf32>
    %88 = vector.broadcast %28 : vector<1x32xf32> to vector<16x32xf32>
    %89 = arith.mulf %87, %88 : vector<16x32xf32>
    %cst_48 = arith.constant dense<0.000000e+00> : vector<16x192xf32>
    %90 = tpu.matmul %89, %25, %cst_48 {dimension_numbers = #tpu.dot_dimension_numbers<[1], [0], [0], [1], [0, 0, 1, 1], [], []>} : vector<16x32xf32>, vector<32x192xf32>, vector<16x192xf32> -> vector<16x192xf32>
    %91 = vector.extract_strided_slice %90 {offsets = [0, 0], sizes = [16, 96], strides = [1, 1]} : vector<16x192xf32> to vector<16x96xf32>
    %92 = vector.extract_strided_slice %90 {offsets = [0, 96], sizes = [16, 96], strides = [1, 1]} : vector<16x192xf32> to vector<16x96xf32>
    %cst_49 = arith.constant 0.000000e+00 : f32
    %93 = vector.broadcast %cst_49 : f32 to vector<16x96xf32>
    %94 = arith.subf %93, %91 : vector<16x96xf32>
    %95 = math.exp %94 : vector<16x96xf32>
    %cst_50 = arith.constant 1.000000e+00 : f32
    %96 = vector.broadcast %cst_50 : f32 to vector<16x96xf32>
    %97 = arith.addf %96, %95 : vector<16x96xf32>
    %98 = tpu.reciprocal %97 {approx = true} : vector<16x96xf32> -> vector<16x96xf32>
    %99 = arith.mulf %91, %98 : vector<16x96xf32>
    %100 = arith.mulf %99, %92 : vector<16x96xf32>
    %cst_51 = arith.constant dense<0.000000e+00> : vector<16x32xf32>
    %101 = tpu.matmul %100, %26, %cst_51 {dimension_numbers = #tpu.dot_dimension_numbers<[1], [0], [0], [1], [0, 0, 1, 1], [], []>} : vector<16x96xf32>, vector<96x32xf32>, vector<16x32xf32> -> vector<16x32xf32>
    %102 = arith.addf %77, %101 : vector<16x32xf32>
    %c96 = arith.constant 96 : index
    %c0_52 = arith.constant 0 : index
    %103 = vector.load %arg2[%c96, %c0_52] : memref<224x256xf32, #tpu.memory_space<vmem>>, vector<32x64xf32>
    %c128 = arith.constant 128 : index
    %c0_53 = arith.constant 0 : index
    %104 = vector.load %arg2[%c128, %c0_53] : memref<224x256xf32, #tpu.memory_space<vmem>>, vector<32x32xf32>
    %c160 = arith.constant 160 : index
    %c0_54 = arith.constant 0 : index
    %105 = vector.load %arg2[%c160, %c0_54] : memref<224x256xf32, #tpu.memory_space<vmem>>, vector<32x192xf32>
    %c352 = arith.constant 352 : index
    %c0_55 = arith.constant 0 : index
    %106 = vector.load %arg3[%c352, %c0_55] : memref<456x32xf32, #tpu.memory_space<vmem>>, vector<96x32xf32>
    %c450 = arith.constant 450 : index
    %c0_56 = arith.constant 0 : index
    %107 = vector.load %arg3[%c450, %c0_56] : memref<456x32xf32, #tpu.memory_space<vmem>>, vector<1x32xf32>
    %c451 = arith.constant 451 : index
    %c0_57 = arith.constant 0 : index
    %108 = vector.load %arg3[%c451, %c0_57] : memref<456x32xf32, #tpu.memory_space<vmem>>, vector<1x32xf32>
    %109 = arith.mulf %102, %102 : vector<16x32xf32>
    %cst_58 = arith.constant dense<0.000000e+00> : vector<16xf32>
    %110 = vector.multi_reduction <add>, %109, %cst_58 [1] : vector<16x32xf32> to vector<16xf32>
    %111 = vector.shape_cast %110 : vector<16xf32> to vector<16x1xf32>
    %cst_59 = arith.constant 3.200000e+01 : f32
    %112 = vector.broadcast %cst_59 : f32 to vector<16x1xf32>
    %113 = arith.divf %111, %112 : vector<16x1xf32>
    %cst_60 = arith.constant 9.99999974E-6 : f32
    %114 = vector.broadcast %cst_60 : f32 to vector<16x1xf32>
    %115 = arith.addf %113, %114 : vector<16x1xf32>
    %116 = math.rsqrt %115 : vector<16x1xf32>
    %117 = vector.broadcast %116 : vector<16x1xf32> to vector<16x32xf32>
    %118 = arith.mulf %102, %117 : vector<16x32xf32>
    %119 = vector.broadcast %107 : vector<1x32xf32> to vector<16x32xf32>
    %120 = arith.mulf %118, %119 : vector<16x32xf32>
    %cst_61 = arith.constant dense<0.000000e+00> : vector<16x64xf32>
    %121 = tpu.matmul %120, %103, %cst_61 {dimension_numbers = #tpu.dot_dimension_numbers<[1], [0], [0], [1], [0, 0, 1, 1], [], []>} : vector<16x32xf32>, vector<32x64xf32>, vector<16x64xf32> -> vector<16x64xf32>
    %122 = vector.extract_strided_slice %121 {offsets = [0, 0], sizes = [16, 48], strides = [1, 1]} : vector<16x64xf32> to vector<16x48xf32>
    %123 = vector.extract_strided_slice %121 {offsets = [0, 48], sizes = [16, 16], strides = [1, 1]} : vector<16x64xf32> to vector<16x16xf32>
    %124 = arith.mulf %122, %9 : vector<16x48xf32>
    %cst_62 = arith.constant dense<0.000000e+00> : vector<16x48xf32>
    %125 = tpu.matmul %122, %6, %cst_62 {dimension_numbers = #tpu.dot_dimension_numbers<[1], [0], [0], [1], [0, 0, 1, 1], [], []>} : vector<16x48xf32>, vector<48x48xf32>, vector<16x48xf32> -> vector<16x48xf32>
    %126 = arith.mulf %125, %10 : vector<16x48xf32>
    %127 = arith.addf %124, %126 : vector<16x48xf32>
    %128 = vector.extract_strided_slice %127 {offsets = [0, 0], sizes = [16, 32], strides = [1, 1]} : vector<16x48xf32> to vector<16x32xf32>
    %129 = vector.extract_strided_slice %127 {offsets = [0, 32], sizes = [16, 16], strides = [1, 1]} : vector<16x48xf32> to vector<16x16xf32>
    %cst_63 = arith.constant dense<0.000000e+00> : vector<16x128xf32>
    %130 = tpu.matmul %128, %0, %cst_63 {dimension_numbers = #tpu.dot_dimension_numbers<[1], [0], [0], [1], [0, 0, 1, 1], [], []>} : vector<16x32xf32>, vector<32x128xf32>, vector<16x128xf32> -> vector<16x128xf32>
    %cst_64 = arith.constant dense<0.000000e+00> : vector<16x128xf32>
    %131 = tpu.matmul %129, %1, %cst_64 {dimension_numbers = #tpu.dot_dimension_numbers<[1], [0], [0], [1], [0, 0, 1, 1], [], []>} : vector<16x16xf32>, vector<16x128xf32>, vector<16x128xf32> -> vector<16x128xf32>
    %cst_65 = arith.constant dense<0.000000e+00> : vector<16x128xf32>
    %132 = tpu.matmul %123, %1, %cst_65 {dimension_numbers = #tpu.dot_dimension_numbers<[1], [0], [0], [1], [0, 0, 1, 1], [], []>} : vector<16x16xf32>, vector<16x128xf32>, vector<16x128xf32> -> vector<16x128xf32>
    %133 = arith.mulf %130, %131 : vector<16x128xf32>
    %cst_66 = arith.constant dense<0.000000e+00> : vector<16x16xf32>
    %134 = tpu.matmul %133, %3, %cst_66 {dimension_numbers = #tpu.dot_dimension_numbers<[1], [0], [0], [1], [0, 0, 1, 1], [], []>} : vector<16x128xf32>, vector<128x16xf32>, vector<16x16xf32> -> vector<16x16xf32>
    %cst_67 = arith.constant dense<0xFF800000> : vector<16xf32>
    %135 = vector.multi_reduction <maximumf>, %134, %cst_67 [1] : vector<16x16xf32> to vector<16xf32>
    %136 = vector.shape_cast %135 : vector<16xf32> to vector<16x1xf32>
    %137 = vector.broadcast %136 : vector<16x1xf32> to vector<16x16xf32>
    %138 = arith.subf %134, %137 : vector<16x16xf32>
    %139 = math.exp %138 : vector<16x16xf32>
    %cst_68 = arith.constant dense<0.000000e+00> : vector<16x32xf32>
    %140 = tpu.matmul %139, %5, %cst_68 {dimension_numbers = #tpu.dot_dimension_numbers<[1], [0], [0], [1], [0, 0, 1, 1], [], []>} : vector<16x16xf32>, vector<16x32xf32>, vector<16x32xf32> -> vector<16x32xf32>
    %cst_69 = arith.constant dense<0.000000e+00> : vector<16x128xf32>
    %141 = tpu.matmul %139, %2, %cst_69 {dimension_numbers = #tpu.dot_dimension_numbers<[1], [0], [0], [1], [0, 0, 1, 1], [], []>} : vector<16x16xf32>, vector<16x128xf32>, vector<16x128xf32> -> vector<16x128xf32>
    %142 = arith.mulf %141, %132 : vector<16x128xf32>
    %cst_70 = arith.constant dense<0.000000e+00> : vector<16x32xf32>
    %143 = tpu.matmul %142, %4, %cst_70 {dimension_numbers = #tpu.dot_dimension_numbers<[1], [0], [0], [1], [0, 0, 1, 1], [], []>} : vector<16x128xf32>, vector<128x32xf32>, vector<16x32xf32> -> vector<16x32xf32>
    %144 = tpu.reciprocal %140 {approx = true} : vector<16x32xf32> -> vector<16x32xf32>
    %145 = arith.mulf %143, %144 : vector<16x32xf32>
    %146 = vector.extract_strided_slice %145 {offsets = [0, 0], sizes = [16, 8], strides = [1, 1]} : vector<16x32xf32> to vector<16x8xf32>
    %147 = vector.extract_strided_slice %145 {offsets = [0, 8], sizes = [16, 8], strides = [1, 1]} : vector<16x32xf32> to vector<16x8xf32>
    %148 = vector.extract_strided_slice %145 {offsets = [0, 16], sizes = [16, 8], strides = [1, 1]} : vector<16x32xf32> to vector<16x8xf32>
    %149 = vector.extract_strided_slice %145 {offsets = [0, 24], sizes = [16, 8], strides = [1, 1]} : vector<16x32xf32> to vector<16x8xf32>
    %150 = tpu.concatenate %146, %147, %148, %149 in 0 : vector<16x8xf32>, vector<16x8xf32>, vector<16x8xf32>, vector<16x8xf32> -> vector<64x8xf32>
    %cst_71 = arith.constant dense<0.000000e+00> : vector<16x8xf32>
    %151 = tpu.matmul %11, %150, %cst_71 {dimension_numbers = #tpu.dot_dimension_numbers<[1], [0], [0], [1], [0, 0, 1, 1], [], []>} : vector<16x64xf32>, vector<64x8xf32>, vector<16x8xf32> -> vector<16x8xf32>
    %cst_72 = arith.constant dense<0.000000e+00> : vector<16x8xf32>
    %152 = tpu.matmul %12, %150, %cst_72 {dimension_numbers = #tpu.dot_dimension_numbers<[1], [0], [0], [1], [0, 0, 1, 1], [], []>} : vector<16x64xf32>, vector<64x8xf32>, vector<16x8xf32> -> vector<16x8xf32>
    %cst_73 = arith.constant dense<0.000000e+00> : vector<16x8xf32>
    %153 = tpu.matmul %13, %150, %cst_73 {dimension_numbers = #tpu.dot_dimension_numbers<[1], [0], [0], [1], [0, 0, 1, 1], [], []>} : vector<16x64xf32>, vector<64x8xf32>, vector<16x8xf32> -> vector<16x8xf32>
    %cst_74 = arith.constant dense<0.000000e+00> : vector<16x8xf32>
    %154 = tpu.matmul %14, %150, %cst_74 {dimension_numbers = #tpu.dot_dimension_numbers<[1], [0], [0], [1], [0, 0, 1, 1], [], []>} : vector<16x64xf32>, vector<64x8xf32>, vector<16x8xf32> -> vector<16x8xf32>
    %155 = tpu.concatenate %151, %152, %153, %154 in 1 : vector<16x8xf32>, vector<16x8xf32>, vector<16x8xf32>, vector<16x8xf32> -> vector<16x32xf32>
    %cst_75 = arith.constant dense<0.000000e+00> : vector<16x32xf32>
    %156 = tpu.matmul %155, %104, %cst_75 {dimension_numbers = #tpu.dot_dimension_numbers<[1], [0], [0], [1], [0, 0, 1, 1], [], []>} : vector<16x32xf32>, vector<32x32xf32>, vector<16x32xf32> -> vector<16x32xf32>
    %157 = arith.addf %102, %156 : vector<16x32xf32>
    %158 = arith.mulf %157, %157 : vector<16x32xf32>
    %cst_76 = arith.constant dense<0.000000e+00> : vector<16xf32>
    %159 = vector.multi_reduction <add>, %158, %cst_76 [1] : vector<16x32xf32> to vector<16xf32>
    %160 = vector.shape_cast %159 : vector<16xf32> to vector<16x1xf32>
    %cst_77 = arith.constant 3.200000e+01 : f32
    %161 = vector.broadcast %cst_77 : f32 to vector<16x1xf32>
    %162 = arith.divf %160, %161 : vector<16x1xf32>
    %cst_78 = arith.constant 9.99999974E-6 : f32
    %163 = vector.broadcast %cst_78 : f32 to vector<16x1xf32>
    %164 = arith.addf %162, %163 : vector<16x1xf32>
    %165 = math.rsqrt %164 : vector<16x1xf32>
    %166 = vector.broadcast %165 : vector<16x1xf32> to vector<16x32xf32>
    %167 = arith.mulf %157, %166 : vector<16x32xf32>
    %168 = vector.broadcast %108 : vector<1x32xf32> to vector<16x32xf32>
    %169 = arith.mulf %167, %168 : vector<16x32xf32>
    %cst_79 = arith.constant dense<0.000000e+00> : vector<16x192xf32>
    %170 = tpu.matmul %169, %105, %cst_79 {dimension_numbers = #tpu.dot_dimension_numbers<[1], [0], [0], [1], [0, 0, 1, 1], [], []>} : vector<16x32xf32>, vector<32x192xf32>, vector<16x192xf32> -> vector<16x192xf32>
    %171 = vector.extract_strided_slice %170 {offsets = [0, 0], sizes = [16, 96], strides = [1, 1]} : vector<16x192xf32> to vector<16x96xf32>
    %172 = vector.extract_strided_slice %170 {offsets = [0, 96], sizes = [16, 96], strides = [1, 1]} : vector<16x192xf32> to vector<16x96xf32>
    %cst_80 = arith.constant 0.000000e+00 : f32
    %173 = vector.broadcast %cst_80 : f32 to vector<16x96xf32>
    %174 = arith.subf %173, %171 : vector<16x96xf32>
    %175 = math.exp %174 : vector<16x96xf32>
    %cst_81 = arith.constant 1.000000e+00 : f32
    %176 = vector.broadcast %cst_81 : f32 to vector<16x96xf32>
    %177 = arith.addf %176, %175 : vector<16x96xf32>
    %178 = tpu.reciprocal %177 {approx = true} : vector<16x96xf32> -> vector<16x96xf32>
    %179 = arith.mulf %171, %178 : vector<16x96xf32>
    %180 = arith.mulf %179, %172 : vector<16x96xf32>
    %cst_82 = arith.constant dense<0.000000e+00> : vector<16x32xf32>
    %181 = tpu.matmul %180, %106, %cst_82 {dimension_numbers = #tpu.dot_dimension_numbers<[1], [0], [0], [1], [0, 0, 1, 1], [], []>} : vector<16x96xf32>, vector<96x32xf32>, vector<16x32xf32> -> vector<16x32xf32>
    %182 = arith.addf %157, %181 : vector<16x32xf32>
    %183 = vector.extract_strided_slice %182 {offsets = [7, 0], sizes = [1, 32], strides = [1, 1]} : vector<16x32xf32> to vector<1x32xf32>
    %184 = vector.extract_strided_slice %182 {offsets = [15, 0], sizes = [1, 32], strides = [1, 1]} : vector<16x32xf32> to vector<1x32xf32>
    %185 = tpu.concatenate %183, %184 in 0 : vector<1x32xf32>, vector<1x32xf32> -> vector<2x32xf32>
    %c452 = arith.constant 452 : index
    %c0_83 = arith.constant 0 : index
    %186 = vector.load %arg3[%c452, %c0_83] : memref<456x32xf32, #tpu.memory_space<vmem>>, vector<1x32xf32>
    %c192_84 = arith.constant 192 : index
    %c0_85 = arith.constant 0 : index
    %187 = vector.load %arg2[%c192_84, %c0_85] : memref<224x256xf32, #tpu.memory_space<vmem>>, vector<32x256xf32>
    %188 = arith.mulf %185, %185 : vector<2x32xf32>
    %cst_86 = arith.constant dense<0.000000e+00> : vector<2xf32>
    %189 = vector.multi_reduction <add>, %188, %cst_86 [1] : vector<2x32xf32> to vector<2xf32>
    %190 = vector.shape_cast %189 : vector<2xf32> to vector<2x1xf32>
    %cst_87 = arith.constant 3.200000e+01 : f32
    %191 = vector.broadcast %cst_87 : f32 to vector<2x1xf32>
    %192 = arith.divf %190, %191 : vector<2x1xf32>
    %cst_88 = arith.constant 9.99999974E-6 : f32
    %193 = vector.broadcast %cst_88 : f32 to vector<2x1xf32>
    %194 = arith.addf %192, %193 : vector<2x1xf32>
    %195 = math.rsqrt %194 : vector<2x1xf32>
    %196 = vector.broadcast %195 : vector<2x1xf32> to vector<2x32xf32>
    %197 = arith.mulf %185, %196 : vector<2x32xf32>
    %198 = vector.broadcast %186 : vector<1x32xf32> to vector<2x32xf32>
    %199 = arith.mulf %197, %198 : vector<2x32xf32>
    %cst_89 = arith.constant dense<0.000000e+00> : vector<2x256xf32>
    %200 = tpu.matmul %199, %187, %cst_89 {dimension_numbers = #tpu.dot_dimension_numbers<[1], [0], [0], [1], [0, 0, 1, 1], [], []>} : vector<2x32xf32>, vector<32x256xf32>, vector<2x256xf32> -> vector<2x256xf32>
    %c0_90 = arith.constant 0 : index
    %c0_91 = arith.constant 0 : index
    %201 = vector.load %arg5[%c0_90, %c0_91] : memref<2x256xf32, #tpu.memory_space<vmem>>, vector<2x256xf32>
    tpu.vector_store %arg5[%c0_90, %c0_91], %200 {strides = array<i32>} : memref<2x256xf32, #tpu.memory_space<vmem>>, vector<2x256xf32>,
    return
  }
  func.func @transform_0(%arg0: i32) -> (i32, i32) {
    %c0_i32 = arith.constant 0 : i32
    %c0_i32_0 = arith.constant 0 : i32
    %c0_i32_1 = arith.constant 0 : i32
    return %c0_i32, %c0_i32_0 : i32, i32
  }
  func.func @transform_1(%arg0: i32) -> (i32, i32) {
    %c0_i32 = arith.constant 0 : i32
    %c0_i32_0 = arith.constant 0 : i32
    %c0_i32_1 = arith.constant 0 : i32
    return %c0_i32, %c0_i32_0 : i32, i32
  }
  func.func @transform_2(%arg0: i32) -> (i32, i32) {
    %c0_i32 = arith.constant 0 : i32
    %c0_i32_0 = arith.constant 0 : i32
    %c0_i32_1 = arith.constant 0 : i32
    return %c0_i32, %c0_i32_0 : i32, i32
  }
  func.func @transform_3(%arg0: i32) -> (i32, i32) {
    %c0_i32 = arith.constant 0 : i32
    %c0_i32_0 = arith.constant 0 : i32
    %c0_i32_1 = arith.constant 0 : i32
    return %c0_i32, %c0_i32_0 : i32, i32
  }
  func.func @transform_4(%arg0: i32) -> (i32, i32) {
    %c0_i32 = arith.constant 0 : i32
    %c0_i32_0 = arith.constant 0 : i32
    %c0_i32_1 = arith.constant 0 : i32
    return %c0_i32, %c0_i32_0 : i32, i32
  }
}

</mosaic_0001>

<llo_original>
// kernel: llada_forward.1
$region0: #{llada_forward.1}
  #allocation0 [shape = 'u32[]', space=smem, size = 0x4, offset = 0x4, fixed_abs, tag = 'smem constant byte address 0x4 - core index']
  #allocation1 [shape = 'u32[72,128]{1,0:T(1,128)}', space=vmem, size = 0x9000, scoped, tag = 'internal scratch']
  %s0 = inlined_call_operand.vmem [shape: s32[16,1], index: 0, kind: input, shape index: {}]
  %s1 = inlined_call_operand.hbm [shape: f32[224,256], index: 1, kind: input, shape index: {}]
  %s2 = inlined_call_operand.vmem [shape: f32[456,32], index: 2, kind: input, shape index: {}]
  %s3 = inlined_call_operand.vmem [shape: f32[464,128], index: 3, kind: input, shape index: {}]
  %s4 = inlined_call_operand.vmem [shape: f32[2,256], index: 4, kind: output, shape index: {}]
  %s5 = sld [smem:[#allocation0]]
  $region30: #{llada_forward.1} parent=0
    _
  %s7 = ssub.s32 1, %s5
  %s8 = scalar_select 0, %s7, %s5
  $region1: #{llada_forward.1} parent=0
    #allocation2 [shape = 'u8[229376]{0}', space=vmem, size = 0x38000, scoped, tag = 'input window, operand 1, single buffered']
    #allocation3 [shape = 's32[1]{0}', space=sflag, size = 0x4, scoped, tag = 'scoped memory for llada_forward.1']
    %9 = vsyncpa [#allocation3], 0
    // Predicated region
    $region2: #{llada_forward.1} parent=1 // pred_check
      _
    $region3: #{llada_forward.1} parent=1 // pred_check_branch
      %11 = sbr.rel (0) target = $region5
    $region4: #{llada_forward.1} parent=1 // pred_region
      _
    $region5: #{llada_forward.1} parent=1 // pred_fallthru
      _
    // Predicated region
    $region6: #{llada_forward.1} parent=1 // pred_check
      _
    $region7: #{llada_forward.1} parent=1 // pred_check_branch
      %13 = sbr.rel (0) target = $region9
    $region8: #{llada_forward.1} parent=1 // pred_region
      %15 = vsyncadd [#allocation3], 0
      %s16 = sshll.u32 %s1, 4
      %s17 = int_to_ptr.hbm [resolvable:$true] %s16
      %s18 = sshll.u32 [#allocation2], 4
      %s19 = int_to_ptr.vmem [resolvable:$true] %s18
      %24 = dma.hbm_to_vmem [thread:$0]  %s17, 7168, %s19, [#allocation3], 256, 256, 16
    $region9: #{llada_forward.1} parent=1 // pred_fallthru
      _
    // Predicated region
    $region10: #{llada_forward.1} parent=1 // pred_check
      _
    $region11: #{llada_forward.1} parent=1 // pred_check_branch
      %26 = sbr.rel (0) target = $region13
    $region12: #{llada_forward.1} parent=1 // pred_region
      _
    $region13: #{llada_forward.1} parent=1 // pred_fallthru
      _
    // Predicated region
    $region14: #{llada_forward.1} parent=1 // pred_check
      _
    $region15: #{llada_forward.1} parent=1 // pred_check_branch
      %28 = sbr.rel (0) target = $region17
    $region16: #{llada_forward.1} parent=1 // pred_region
      _
    $region17: #{llada_forward.1} parent=1 // pred_fallthru
      _
    // Predicated region
    $region18: #{llada_forward.1} parent=1 // pred_check
      _
    $region19: #{llada_forward.1} parent=1 // pred_check_branch
      %30 = sbr.rel (0) target = $region21
    $region20: #{llada_forward.1} parent=1 // pred_region
      %32 = dma.done [#allocation3], 7168
    $region21: #{llada_forward.1} parent=1 // pred_fallthru
      _
    %v33 = vld [vmem:[%s3] sm:$0xff]
    %v34 = vld [vmem:[%s3 + $0x8] sm:$0xff]
    %v35 = vld [vmem:[%s3 + $0x10] sm:$0xff]
    %v36 = vld [vmem:[%s3 + $0x18] sm:$0xff]
    %v37 = vld [vmem:[%s3 + $0x20] sm:$0xff]
    %v38 = vld [vmem:[%s3 + $0x28] sm:$0xff]
    %v39 = vld [vmem:[%s3 + $0x30] sm:$0xff]
    %v40 = vld [vmem:[%s3 + $0x38] sm:$0xff]
    %v41 = vld [vmem:[%s3 + $0x40] sm:$0xff]
    %v42 = vld [vmem:[%s3 + $0x48] sm:$0xff]
    %v43 = vld [vmem:[%s3 + $0x50] sm:$0xff]
    %v44 = vld [vmem:[%s3 + $0x58] sm:$0xff]
    %v45 = vld [vmem:[%s3 + $0x60] sm:$0xff]
    %v46 = vld [vmem:[%s3 + $0x68] sm:$0xff]
    %v47 = vld [vmem:[%s3 + $0x70] sm:$0xff]
    %v48 = vld [vmem:[%s3 + $0x78] sm:$0xff]
    %v49 = vld [vmem:[%s3 + $0x80] sm:$0xff]
    %v50 = vld [vmem:[%s3 + $0x88] sm:$0xff]
    %v51 = vld [vmem:[%s3 + $0x90] sm:$0xff]
    %v52 = vld [vmem:[%s3 + $0x98] sm:$0xff]
    %v53 = vld [vmem:[%s3 + $0xa0] sm:$0xff]
    %v54 = vld [vmem:[%s3 + $0xa8] sm:$0xff]
    %v55 = vld [vmem:[%s3 + $0xb0] sm:$0xff]
    %v56 = vld [vmem:[%s3 + $0xb8] sm:$0xff]
    %v57 = vld [vmem:[%s3 + $0xc0] sm:$0xff]
    %v58 = vld [vmem:[%s3 + $0xc8] sm:$0xff]
    %v59 = vld [vmem:[%s3 + $0xd0] sm:$0xff]
    %v60 = vld [vmem:[%s3 + $0xd8] sm:$0xff]
    %v61 = vld [vmem:[%s3 + $0xe0] sm:$0xff]
    %v62 = vld [vmem:[%s3 + $0xe8] sm:$0xff]
    %v63 = vld [vmem:[%s3 + $0xf0] sm:$0xff]
    %v64 = vld [vmem:[%s3 + $0xf8] sm:$0xff]
    %v65 = vld [vmem:[%s3 + $0x100] sm:$0xff]
    %v66 = vld [vmem:[%s3 + $0x108] sm:$0xff]
    %v67 = vld [vmem:[%s3 + $0x110] sm:$0xff]
    %v68 = vld [vmem:[%s3 + $0x118] sm:$0xff]
    %v69 = vld [vmem:[%s3 + $0x120] sm:$0xff]
    %v70 = vld [vmem:[%s3 + $0x128] sm:$0xff]
    %v71 = vld [vmem:[%s3 + $0x130] sm:$0xff]
    %v72 = vld [vmem:[%s3 + $0x138] sm:$0xff]
    %v73 = vld [vmem:[%s3 + $0x140] sm:$0xff]
    %v74 = vld [vmem:[%s3 + $0x148] sm:$0xff]
    %v75 = vld [vmem:[%s3 + $0x150] sm:$0xff]
    %v76 = vld [vmem:[%s3 + $0x158] sm:$0xff]
    %v77 = vld [vmem:[%s3 + $0x160] sm:$0xff]
    %v78 = vld [vmem:[%s3 + $0x168] sm:$0xff]
    %v79 = vld [vmem:[%s3 + $0x170] sm:$0xff]
    %v80 = vld [vmem:[%s3 + $0x178] sm:$0xff]
    %v81 = vld [vmem:[%s3 + $0x180] sm:$0xff]
    %v82 = vld [vmem:[%s3 + $0x188] sm:$0xff]
    %v83 = vld [vmem:[%s3 + $0x190] sm:$0xff]
    %v84 = vld [vmem:[%s3 + $0x198] sm:$0xff]
    %v85 = vld [vmem:[%s3 + $0x1a0] sm:$0xff]
    %v86 = vld [vmem:[%s3 + $0x1a8] sm:$0xff]
    %v87 = vld [vmem:[%s3 + $0x1b0] sm:$0xff]
    %v88 = vld [vmem:[%s3 + $0x1b8] sm:$0xff]
    %v89 = vld [vmem:[%s3 + $0x1c0] sm:$0xff]
    %v90 = vld [vmem:[%s3 + $0x1c8] sm:$0xff]
    %v91 = vld [vmem:[%s2] sm:$0xff]
    %v92 = vld [vmem:[%s2 + $0x8] sm:$0xff]
    %v93 = vld [vmem:[%s2 + $0x10] sm:$0xff]
    %v94 = vld [vmem:[%s2 + $0x18] sm:$0xff]
    %v95 = vld [vmem:[%s2 + $0x20] sm:$0xff]
    %v96 = vld [vmem:[%s2 + $0x28] sm:$0xff]
    %v97 = vld [vmem:[%s2 + $0x30] sm:$0xff]
    %v98 = vld [vmem:[%s2 + $0x38] sm:$0xff]
    %v99 = vld [vmem:[%s2 + $0x40] sm:$0xff]
    %v100 = vld [vmem:[%s2 + $0x48] sm:$0xff]
    %v101 = vld [vmem:[%s2 + $0x50] sm:$0xff]
    %v102 = vld [vmem:[%s2 + $0x58] sm:$0xff]
    %v103 = vld [vmem:[%s2 + $0x60] sm:$0xff]
    %v104 = vld [vmem:[%s2 + $0x68] sm:$0xff]
    %v105 = vld [vmem:[%s2 + $0x70] sm:$0xff]
    %v106 = vld [vmem:[%s2 + $0x78] sm:$0xff]
    %v107 = vld [vmem:[%s2 + $0x80] sm:$0xff]
    %v108 = vld [vmem:[%s2 + $0x88] sm:$0xff]
    %v109 = vld [vmem:[%s2 + $0x90] sm:$0xff]
    %v110 = vld [vmem:[%s2 + $0x98] sm:$0xff]
    %v111 = vld [vmem:[%s2 + $0xa0] sm:$0xff]
    %v112 = vld [vmem:[%s2 + $0xa8] sm:$0xff]
    %v113 = vld [vmem:[%s2 + $0xb0] sm:$0xff]
    %v114 = vld [vmem:[%s2 + $0xb8] sm:$0xff]
    %v115 = vld [vmem:[%s2 + $0xc0] sm:$0xff]
    %v116 = vld [vmem:[%s2 + $0xc8] sm:$0xff]
    %v117 = vld [vmem:[%s2 + $0xd0] sm:$0xff]
    %v118 = vld [vmem:[%s2 + $0xd8] sm:$0xff]
    %v119 = vld [vmem:[%s2 + $0xe0] sm:$0xff]
    %v120 = vld [vmem:[%s2 + $0xe8] sm:$0xff]
    %v121 = vld [vmem:[%s2 + $0xf0] sm:$0xff]
    %v122 = vld [vmem:[%s2 + $0xf8] sm:$0xff]
    %v123 = vlaneseq
    %v124 = vand.u32 %v123, 127
    %v125 = vadd.s32 %v124, 128
    %v126 = vld [vmem:[%s0] sm:$0xff]
    %v127 = vld [vmem:[%s0 + $0x8] sm:$0xff]
    %128 = vset.pattern.permute.xlu0 0
    %129 = vperm.xlu0 %128, %v126
    %v130 = vpop.permute.xlu0 %129
    %131 = vset.pattern.permute.xlu0 0
    %132 = vperm.xlu0 %131, %v127
    %v133 = vpop.permute.xlu0 %132
    %vm134 = vcmp.eq.s32.totalorder %v130, %v124
    %vm135 = vcmp.eq.s32.totalorder %v130, %v125
    %vm136 = vcmp.eq.s32.totalorder %v133, %v124
    %vm137 = vcmp.eq.s32.totalorder %v133, %v125
    %v138 = vsel %vm134, 1, 0
    %v139 = vsel %vm135, 1, 0
    %v140 = vsel %vm136, 1, 0
    %v141 = vsel %vm137, 1, 0
    %v142 = vcvt.s32.f32 %v138
    %v143 = vcvt.s32.f32 %v139
    %v144 = vcvt.s32.f32 %v140
    %v145 = vcvt.s32.f32 %v141
    %146 = vmatpush.msra.mxu0 %v106
    %147 = vmatpush.msra.mxu0 %v105
    %148 = vmatpush.msra.mxu0 %v104
    %149 = vmatpush.msra.mxu0 %v103
    %150 = vmatpush.msra.mxu0 %v102
    %151 = vmatpush.msra.mxu0 %v101
    %152 = vmatpush.msra.mxu0 %v100
    %153 = vmatpush.msra.mxu0 %v99
    %154 = vmatpush.msra.mxu0 %v98
    %155 = vmatpush.msra.mxu0 %v97
    %156 = vmatpush.msra.mxu0 %v96
    %157 = vmatpush.msra.mxu0 %v95
    %158 = vmatpush.msra.mxu0 %v94
    %159 = vmatpush.msra.mxu0 %v93
    %160 = vmatpush.msra.mxu0 %v92
    %161 = vmatpush.msra.mxu0 %v91
    %162 = vmatmul.f32.gmra.mxu0 %v142
    %v163 = vpop.f32.mrf.mxu0
    %v164 = vadd.f32 0.0, %v163
    %165 = vmatmul.f32.gmra.mxu0 %v144
    %v166 = vpop.f32.mrf.mxu0
    %v167 = vadd.f32 0.0, %v166
    %168 = vdwg.mxu0
    %169 = vmatpush.msra.mxu0 %v122
    %170 = vmatpush.msra.mxu0 %v121
    %171 = vmatpush.msra.mxu0 %v120
    %172 = vmatpush.msra.mxu0 %v119
    %173 = vmatpush.msra.mxu0 %v118
    %174 = vmatpush.msra.mxu0 %v117
    %175 = vmatpush.msra.mxu0 %v116
    %176 = vmatpush.msra.mxu0 %v115
    %177 = vmatpush.msra.mxu0 %v114
    %178 = vmatpush.msra.mxu0 %v113
    %179 = vmatpush.msra.mxu0 %v112
    %180 = vmatpush.msra.mxu0 %v111
    %181 = vmatpush.msra.mxu0 %v110
    %182 = vmatpush.msra.mxu0 %v109
    %183 = vmatpush.msra.mxu0 %v108
    %184 = vmatpush.msra.mxu0 %v107
    %185 = vmatmul.f32.gmra.mxu0 %v143
    %v186 = vpop.f32.mrf.mxu0
    %v187 = vadd.f32 %v164, %v186
    %188 = vmatmul.f32.gmra.mxu0 %v145
    %v189 = vpop.f32.mrf.mxu0
    %v190 = vadd.f32 %v167, %v189
    %191 = vdwg.mxu0
    %v192 = vld [vmem:[#allocation2] sm:$0xff]
    %v193 = vld [vmem:[#allocation2 + $0x10] sm:$0xff]
    %v194 = vld [vmem:[#allocation2 + $0x20] sm:$0xff]
    %v195 = vld [vmem:[#allocation2 + $0x30] sm:$0xff]
    %v196 = vld [vmem:[#allocation2 + $0x40] sm:$0xff]
    %v197 = vld [vmem:[#allocation2 + $0x50] sm:$0xff]
    %v198 = vld [vmem:[#allocation2 + $0x60] sm:$0xff]
    %v199 = vld [vmem:[#allocation2 + $0x70] sm:$0xff]
    %v200 = vld [vmem:[#allocation2 + $0x80] sm:$0xff]
    %v201 = vld [vmem:[#allocation2 + $0x88] sm:$0xff]
    %v202 = vld [vmem:[#allocation2 + $0x90] sm:$0xff]
    %v203 = vld [vmem:[#allocation2 + $0x98] sm:$0xff]
    %v204 = vld [vmem:[#allocation2 + $0xa0] sm:$0xff]
    %v205 = vld [vmem:[#allocation2 + $0xa8] sm:$0xff]
    %v206 = vld [vmem:[#allocation2 + $0xb0] sm:$0xff]
    %v207 = vld [vmem:[#allocation2 + $0xb8] sm:$0xff]
    %v208 = vld [vmem:[%s2 + $0x100] sm:$0xff]
    %v209 = vld [vmem:[%s2 + $0x108] sm:$0xff]
    %v210 = vld [vmem:[%s2 + $0x110] sm:$0xff]
    %v211 = vld [vmem:[%s2 + $0x118] sm:$0xff]
    %v212 = vld [vmem:[%s2 + $0x120] sm:$0xff]
    %v213 = vld [vmem:[%s2 + $0x128] sm:$0xff]
    %v214 = vld [vmem:[%s2 + $0x130] sm:$0xff]
    %v215 = vld [vmem:[%s2 + $0x138] sm:$0xff]
    %v216 = vld [vmem:[%s2 + $0x140] sm:$0xff]
    %v217 = vld [vmem:[%s2 + $0x148] sm:$0xff]
    %v218 = vld [vmem:[%s2 + $0x150] sm:$0xff]
    %v219 = vld [vmem:[%s2 + $0x158] sm:$0xff]
    %v220 = vld [vmem:[%s2 + $0x1c0] sm:$0x1]
    %v221 = vld [vmem:[%s2 + $0x1c1] sm:$0x1]
    %v222 = vmul.f32 %v187, %v187
    %v223 = vmul.f32 %v190, %v190
    %vm224 = vcmask 261120
    %v225 = vsel %vm224, %v222, 0.0
    %226 = vadd.xlane.f32.xlu0 %v225
    %v227 = vpop.xlane.xlu0 %226
    %v228 = vsel %vm224, %v223, 0.0
    %229 = vadd.xlane.f32.xlu0 %v228
    %v230 = vpop.xlane.xlu0 %229
    %v231 = vrcp.pop 32.0
    %v232 = vmul.f32 32.0, %v231
    %v233 = vsub.f32 1.0, %v232
    %v234 = vmul.f32 %v231, %v233
    %v235 = vadd.f32 %v231, %v234
    %vm236 = vweird.f32 %v231
    %v237 = vsel %vm236, %v231, %v235
    %v238 = vmul.f32 %v227, %v237
    %v239 = vmul.f32 %v230, %v237
    %v240 = vadd.f32 %v238, 1e-05
    %v241 = vadd.f32 %v239, 1e-05
    %v242 = vrsqrt.pop %v240
    %v243 = vmul.f32 %v242, %v240
    %v244 = vmul.f32 %v243, %v242
    %v245 = vmul.f32 0.5, %v244
    %v246 = vsub.f32 1.5, %v245
    %v247 = vmul.f32 %v242, %v246
    %vm248 = vweird.f32 %v240
    %vm249 = vweird.f32 %v242
    %vm250 = vmor %vm248, %vm249
    %v251 = vsel %vm250, %v242, %v247
    %v252 = vrsqrt.pop %v241
    %v253 = vmul.f32 %v252, %v241
    %v254 = vmul.f32 %v253, %v252
    %v255 = vmul.f32 0.5, %v254
    %v256 = vsub.f32 1.5, %v255
    %v257 = vmul.f32 %v252, %v256
    %vm258 = vweird.f32 %v241
    %vm259 = vweird.f32 %v252
    %vm260 = vmor %vm258, %vm259
    %v261 = vsel %vm260, %v252, %v257
    %v262 = vmul.f32 %v187, %v251
    %v263 = vmul.f32 %v190, %v261
    %v264 = vperm.slane %v220, 0
    %v265 = vmul.f32 %v262, %v264
    %v266 = vmul.f32 %v263, %v264
    %v268 = vsel %vm224, %v265, 0
    %v271 = vsel %vm224, %v266, 0
    %273 = vmatpush.msra.mxu0 0.0
    %274 = vmatpush.msra.mxu0 0.0
    %275 = vmatpush.msra.mxu0 0.0
    %276 = vmatpush.msra.mxu0 0.0
    %277 = vmatpush.msra.mxu0 0.0
    %278 = vmatpush.msra.mxu0 0.0
    %279 = vmatpush.msra.mxu0 0.0
    %280 = vmatpush.msra.mxu0 0.0
    %281 = vmatpush.msra.mxu0 0.0
    %282 = vmatpush.msra.mxu0 0.0
    %283 = vmatpush.msra.mxu0 0.0
    %284 = vmatpush.msra.mxu0 0.0
    %285 = vmatpush.msra.mxu0 %v195
    %286 = vmatpush.msra.mxu0 %v194
    %287 = vmatpush.msra.mxu0 %v193
    %288 = vmatpush.msra.mxu0 %v192
    %289 = vmatmul.f32.gmra.mxu0 %v268
    %v290 = vpop.f32.mrf.mxu0
    %v291 = vadd.f32 0.0, %v290
    %292 = vmatmul.f32.gmra.mxu0 %v271
    %v293 = vpop.f32.mrf.mxu0
    %v294 = vadd.f32 0.0, %v293
    %295 = vdwg.mxu0
    %v296 = vmul.f32 %v291, %v81
    %v297 = vmul.f32 %v294, %v81
    %vm298 = vcmask 392192
    %v300 = vsel %vm298, %v291, 0
    %v303 = vsel %vm298, %v294, 0
    %305 = vmatpush.msra.mxu0 0.0
    %306 = vmatpush.msra.mxu0 0.0
    %307 = vmatpush.msra.mxu0 0.0
    %308 = vmatpush.msra.mxu0 0.0
    %309 = vmatpush.msra.mxu0 0.0
    %310 = vmatpush.msra.mxu0 0.0
    %311 = vmatpush.msra.mxu0 0.0
    %312 = vmatpush.msra.mxu0 0.0
    %313 = vmatpush.msra.mxu0 0.0
    %314 = vmatpush.msra.mxu0 0.0
    %315 = vmatpush.msra.mxu0 %v80
    %316 = vmatpush.msra.mxu0 %v79
    %317 = vmatpush.msra.mxu0 %v78
    %318 = vmatpush.msra.mxu0 %v77
    %319 = vmatpush.msra.mxu0 %v76
    %320 = vmatpush.msra.mxu0 %v75
    %321 = vmatmul.f32.gmra.mxu0 %v300
    %v322 = vpop.f32.mrf.mxu0
    %v323 = vadd.f32 0.0, %v322
    %324 = vmatmul.f32.gmra.mxu0 %v303
    %v325 = vpop.f32.mrf.mxu0
    %v326 = vadd.f32 0.0, %v325
    %327 = vdwg.mxu0
    %v328 = vmul.f32 %v323, %v82
    %v329 = vmul.f32 %v326, %v82
    %v330 = vadd.f32 %v296, %v328
    %v331 = vadd.f32 %v297, %v329
    %v333 = vsel %vm224, %v330, 0
    %v336 = vsel %vm224, %v331, 0
    %338 = vmatpush.msra.mxu0 0.0
    %339 = vmatpush.msra.mxu0 0.0
    %340 = vmatpush.msra.mxu0 0.0
    %341 = vmatpush.msra.mxu0 0.0
    %342 = vmatpush.msra.mxu0 0.0
    %343 = vmatpush.msra.mxu0 0.0
    %344 = vmatpush.msra.mxu0 0.0
    %345 = vmatpush.msra.mxu0 0.0
    %346 = vmatpush.msra.mxu0 0.0
    %347 = vmatpush.msra.mxu0 0.0
    %348 = vmatpush.msra.mxu0 0.0
    %349 = vmatpush.msra.mxu0 0.0
    %350 = vmatpush.msra.mxu0 %v36
    %351 = vmatpush.msra.mxu0 %v35
    %352 = vmatpush.msra.mxu0 %v34
    %353 = vmatpush.msra.mxu0 %v33
    %354 = vmatmul.f32.gmra.mxu0 %v333
    %v355 = vpop.f32.mrf.mxu0
    %v356 = vadd.f32 0.0, %v355
    %357 = vmatmul.f32.gmra.mxu0 %v336
    %v358 = vpop.f32.mrf.mxu0
    %v359 = vadd.f32 0.0, %v358
    %360 = vdwg.mxu0
    %361 = vrot.lane.b32.xlu0 %v330, 96
    %v362 = vpop.permute.xlu0 %361
    %363 = vrot.lane.b32.xlu0 %v331, 96
    %v364 = vpop.permute.xlu0 %363
    %vm365 = vcmask 130048
    %v366 = vsel %vm365, %v362, 0
    %v368 = vsel %vm365, %v364, 0
    %370 = vmatpush.msra.mxu0 0.0
    %371 = vmatpush.msra.mxu0 0.0
    %372 = vmatpush.msra.mxu0 0.0
    %373 = vmatpush.msra.mxu0 0.0
    %374 = vmatpush.msra.mxu0 0.0
    %375 = vmatpush.msra.mxu0 0.0
    %376 = vmatpush.msra.mxu0 0.0
    %377 = vmatpush.msra.mxu0 0.0
    %378 = vmatpush.msra.mxu0 0.0
    %379 = vmatpush.msra.mxu0 0.0
    %380 = vmatpush.msra.mxu0 0.0
    %381 = vmatpush.msra.mxu0 0.0
    %382 = vmatpush.msra.mxu0 0.0
    %383 = vmatpush.msra.mxu0 0.0
    %384 = vmatpush.msra.mxu0 %v38
    %385 = vmatpush.msra.mxu0 %v37
    %386 = vmatmul.f32.gmra.mxu0 %v366
    %v387 = vpop.f32.mrf.mxu0
    %v388 = vadd.f32 0.0, %v387
    %389 = vmatmul.f32.gmra.mxu0 %v368
    %v390 = vpop.f32.mrf.mxu0
    %v391 = vadd.f32 0.0, %v390
    %392 = vdwg.mxu0
    %393 = vrot.lane.b32.xlu0 %v291, 80
    %v394 = vpop.permute.xlu0 %393
    %395 = vrot.lane.b32.xlu0 %v294, 80
    %v396 = vpop.permute.xlu0 %395
    %v397 = vsel %vm365, %v394, 0
    %v399 = vsel %vm365, %v396, 0
    %401 = vmatpush.msra.mxu0 0.0
    %402 = vmatpush.msra.mxu0 0.0
    %403 = vmatpush.msra.mxu0 0.0
    %404 = vmatpush.msra.mxu0 0.0
    %405 = vmatpush.msra.mxu0 0.0
    %406 = vmatpush.msra.mxu0 0.0
    %407 = vmatpush.msra.mxu0 0.0
    %408 = vmatpush.msra.mxu0 0.0
    %409 = vmatpush.msra.mxu0 0.0
    %410 = vmatpush.msra.mxu0 0.0
    %411 = vmatpush.msra.mxu0 0.0
    %412 = vmatpush.msra.mxu0 0.0
    %413 = vmatpush.msra.mxu0 0.0
    %414 = vmatpush.msra.mxu0 0.0
    %415 = vmatpush.msra.mxu0 %v38
    %416 = vmatpush.msra.mxu0 %v37
    %417 = vmatmul.f32.gmra.mxu0 %v397
    %v418 = vpop.f32.mrf.mxu0
    %v419 = vadd.f32 0.0, %v418
    %420 = vmatmul.f32.gmra.mxu0 %v399
    %v421 = vpop.f32.mrf.mxu0
    %v422 = vadd.f32 0.0, %v421
    %423 = vdwg.mxu0
    %v424 = vmul.f32 %v356, %v388
    %v425 = vmul.f32 %v359, %v391
    %426 = vmatpush.msra.mxu0 %v56
    %427 = vmatpush.msra.mxu0 %v55
    %428 = vmatpush.msra.mxu0 %v54
    %429 = vmatpush.msra.mxu0 %v53
    %430 = vmatpush.msra.mxu0 %v52
    %431 = vmatpush.msra.mxu0 %v51
    %432 = vmatpush.msra.mxu0 %v50
    %433 = vmatpush.msra.mxu0 %v49
    %434 = vmatpush.msra.mxu0 %v48
    %435 = vmatpush.msra.mxu0 %v47
    %436 = vmatpush.msra.mxu0 %v46
    %437 = vmatpush.msra.mxu0 %v45
    %438 = vmatpush.msra.mxu0 %v44
    %439 = vmatpush.msra.mxu0 %v43
    %440 = vmatpush.msra.mxu0 %v42
    %441 = vmatpush.msra.mxu0 %v41
    %442 = vmatmul.f32.gmra.mxu0 %v424
    %v443 = vpop.f32.mrf.mxu0
    %v444 = vadd.f32 0.0, %v443
    %445 = vmatmul.f32.gmra.mxu0 %v425
    %v446 = vpop.f32.mrf.mxu0
    %v447 = vadd.f32 0.0, %v446
    %448 = vdwg.mxu0
    %v449 = vsel %vm365, %v444, -inf
    %450 = vmax.xlane.f32.xlu0 %v449
    %v451 = vpop.xlane.xlu0 %450
    %v452 = vsel %vm365, %v447, -inf
    %453 = vmax.xlane.f32.xlu0 %v452
    %v454 = vpop.xlane.xlu0 %453
    %v455 = vsub.f32 %v444, %v451
    %v456 = vsub.f32 %v447, %v454
    %v457 = vmul.f32 %v455, 1.442695
    %v458 = vpow.pop %v457
    %v459 = vmul.f32 %v456, 1.442695
    %v460 = vpow.pop %v459
    %v462 = vsel %vm365, %v458, 0
    %v465 = vsel %vm365, %v460, 0
    %467 = vmatpush.msra.mxu0 0.0
    %468 = vmatpush.msra.mxu0 0.0
    %469 = vmatpush.msra.mxu0 0.0
    %470 = vmatpush.msra.mxu0 0.0
    %471 = vmatpush.msra.mxu0 0.0
    %472 = vmatpush.msra.mxu0 0.0
    %473 = vmatpush.msra.mxu0 0.0
    %474 = vmatpush.msra.mxu0 0.0
    %475 = vmatpush.msra.mxu0 0.0
    %476 = vmatpush.msra.mxu0 0.0
    %477 = vmatpush.msra.mxu0 0.0
    %478 = vmatpush.msra.mxu0 0.0
    %479 = vmatpush.msra.mxu0 0.0
    %480 = vmatpush.msra.mxu0 0.0
    %481 = vmatpush.msra.mxu0 %v74
    %482 = vmatpush.msra.mxu0 %v73
    %483 = vmatmul.f32.gmra.mxu0 %v462
    %v484 = vpop.f32.mrf.mxu0
    %v485 = vadd.f32 0.0, %v484
    %486 = vmatmul.f32.gmra.mxu0 %v465
    %v487 = vpop.f32.mrf.mxu0
    %v488 = vadd.f32 0.0, %v487
    %489 = vdwg.mxu0
    %490 = vmatpush.msra.mxu0 0.0
    %491 = vmatpush.msra.mxu0 0.0
    %492 = vmatpush.msra.mxu0 0.0
    %493 = vmatpush.msra.mxu0 0.0
    %494 = vmatpush.msra.mxu0 0.0
    %495 = vmatpush.msra.mxu0 0.0
    %496 = vmatpush.msra.mxu0 0.0
    %497 = vmatpush.msra.mxu0 0.0
    %498 = vmatpush.msra.mxu0 0.0
    %499 = vmatpush.msra.mxu0 0.0
    %500 = vmatpush.msra.mxu0 0.0
    %501 = vmatpush.msra.mxu0 0.0
    %502 = vmatpush.msra.mxu0 0.0
    %503 = vmatpush.msra.mxu0 0.0
    %504 = vmatpush.msra.mxu0 %v40
    %505 = vmatpush.msra.mxu0 %v39
    %506 = vmatmul.f32.gmra.mxu0 %v462
    %v507 = vpop.f32.mrf.mxu0
    %v508 = vadd.f32 0.0, %v507
    %509 = vmatmul.f32.gmra.mxu0 %v465
    %v510 = vpop.f32.mrf.mxu0
    %v511 = vadd.f32 0.0, %v510
    %512 = vdwg.mxu0
    %v513 = vmul.f32 %v508, %v419
    %v514 = vmul.f32 %v511, %v422
    %515 = vmatpush.msra.mxu0 %v72
    %516 = vmatpush.msra.mxu0 %v71
    %517 = vmatpush.msra.mxu0 %v70
    %518 = vmatpush.msra.mxu0 %v69
    %519 = vmatpush.msra.mxu0 %v68
    %520 = vmatpush.msra.mxu0 %v67
    %521 = vmatpush.msra.mxu0 %v66
    %522 = vmatpush.msra.mxu0 %v65
    %523 = vmatpush.msra.mxu0 %v64
    %524 = vmatpush.msra.mxu0 %v63
    %525 = vmatpush.msra.mxu0 %v62
    %526 = vmatpush.msra.mxu0 %v61
    %527 = vmatpush.msra.mxu0 %v60
    %528 = vmatpush.msra.mxu0 %v59
    %529 = vmatpush.msra.mxu0 %v58
    %530 = vmatpush.msra.mxu0 %v57
    %531 = vmatmul.f32.gmra.mxu0 %v513
    %v532 = vpop.f32.mrf.mxu0
    %v533 = vadd.f32 0.0, %v532
    %534 = vmatmul.f32.gmra.mxu0 %v514
    %v535 = vpop.f32.mrf.mxu0
    %v536 = vadd.f32 0.0, %v535
    %537 = vdwg.mxu0
    %v538 = vrcp.pop %v485
    %v539 = vrcp.pop %v488
    %v540 = vmul.f32 %v533, %v538
    %v541 = vmul.f32 %v536, %v539
    %544 = vrot.lane.b32.xlu0 %v540, 120
    %v545 = vpop.permute.xlu0 %544
    %546 = vrot.lane.b32.xlu0 %v541, 120
    %v547 = vpop.permute.xlu0 %546
    %550 = vrot.lane.b32.xlu0 %v540, 112
    %v551 = vpop.permute.xlu0 %550
    %552 = vrot.lane.b32.xlu0 %v541, 112
    %v553 = vpop.permute.xlu0 %552
    %556 = vrot.lane.b32.xlu0 %v540, 104
    %v557 = vpop.permute.xlu0 %556
    %558 = vrot.lane.b32.xlu0 %v541, 104
    %v559 = vpop.permute.xlu0 %558
    %vm562 = vcmask 523264
    %v564 = vsel %vm562, %v83, 0
    %v567 = vsel %vm562, %v84, 0
    %569 = vmatpush.msra.mxu0 0.0
    %570 = vmatpush.msra.mxu0 0.0
    %571 = vmatpush.msra.mxu0 0.0
    %572 = vmatpush.msra.mxu0 0.0
    %573 = vmatpush.msra.mxu0 0.0
    %574 = vmatpush.msra.mxu0 0.0
    %575 = vmatpush.msra.mxu0 0.0
    %576 = vmatpush.msra.mxu0 0.0
    %577 = vmatpush.msra.mxu0 %v559
    %578 = vmatpush.msra.mxu0 %v557
    %579 = vmatpush.msra.mxu0 %v553
    %580 = vmatpush.msra.mxu0 %v551
    %581 = vmatpush.msra.mxu0 %v547
    %582 = vmatpush.msra.mxu0 %v545
    %583 = vmatpush.msra.mxu0 %v541
    %584 = vmatpush.msra.mxu0 %v540
    %585 = vmatmul.f32.gmra.mxu0 %v564
    %v586 = vpop.f32.mrf.mxu0
    %v587 = vadd.f32 0.0, %v586
    %588 = vmatmul.f32.gmra.mxu0 %v567
    %v589 = vpop.f32.mrf.mxu0
    %v590 = vadd.f32 0.0, %v589
    %591 = vdwg.mxu0
    %v593 = vsel %vm562, %v85, 0
    %v596 = vsel %vm562, %v86, 0
    %598 = vmatpush.msra.mxu0 0.0
    %599 = vmatpush.msra.mxu0 0.0
    %600 = vmatpush.msra.mxu0 0.0
    %601 = vmatpush.msra.mxu0 0.0
    %602 = vmatpush.msra.mxu0 0.0
    %603 = vmatpush.msra.mxu0 0.0
    %604 = vmatpush.msra.mxu0 0.0
    %605 = vmatpush.msra.mxu0 0.0
    %606 = vmatpush.msra.mxu0 %v559
    %607 = vmatpush.msra.mxu0 %v557
    %608 = vmatpush.msra.mxu0 %v553
    %609 = vmatpush.msra.mxu0 %v551
    %610 = vmatpush.msra.mxu0 %v547
    %611 = vmatpush.msra.mxu0 %v545
    %612 = vmatpush.msra.mxu0 %v541
    %613 = vmatpush.msra.mxu0 %v540
    %614 = vmatmul.f32.gmra.mxu0 %v593
    %v615 = vpop.f32.mrf.mxu0
    %v616 = vadd.f32 0.0, %v615
    %617 = vmatmul.f32.gmra.mxu0 %v596
    %v618 = vpop.f32.mrf.mxu0
    %v619 = vadd.f32 0.0, %v618
    %620 = vdwg.mxu0
    %v622 = vsel %vm562, %v87, 0
    %v625 = vsel %vm562, %v88, 0
    %627 = vmatpush.msra.mxu0 0.0
    %628 = vmatpush.msra.mxu0 0.0
    %629 = vmatpush.msra.mxu0 0.0
    %630 = vmatpush.msra.mxu0 0.0
    %631 = vmatpush.msra.mxu0 0.0
    %632 = vmatpush.msra.mxu0 0.0
    %633 = vmatpush.msra.mxu0 0.0
    %634 = vmatpush.msra.mxu0 0.0
    %635 = vmatpush.msra.mxu0 %v559
    %636 = vmatpush.msra.mxu0 %v557
    %637 = vmatpush.msra.mxu0 %v553
    %638 = vmatpush.msra.mxu0 %v551
    %639 = vmatpush.msra.mxu0 %v547
    %640 = vmatpush.msra.mxu0 %v545
    %641 = vmatpush.msra.mxu0 %v541
    %642 = vmatpush.msra.mxu0 %v540
    %643 = vmatmul.f32.gmra.mxu0 %v622
    %v644 = vpop.f32.mrf.mxu0
    %v645 = vadd.f32 0.0, %v644
    %646 = vmatmul.f32.gmra.mxu0 %v625
    %v647 = vpop.f32.mrf.mxu0
    %v648 = vadd.f32 0.0, %v647
    %649 = vdwg.mxu0
    %v651 = vsel %vm562, %v89, 0
    %v654 = vsel %vm562, %v90, 0
    %656 = vmatpush.msra.mxu0 0.0
    %657 = vmatpush.msra.mxu0 0.0
    %658 = vmatpush.msra.mxu0 0.0
    %659 = vmatpush.msra.mxu0 0.0
    %660 = vmatpush.msra.mxu0 0.0
    %661 = vmatpush.msra.mxu0 0.0
    %662 = vmatpush.msra.mxu0 0.0
    %663 = vmatpush.msra.mxu0 0.0
    %664 = vmatpush.msra.mxu0 %v559
    %665 = vmatpush.msra.mxu0 %v557
    %666 = vmatpush.msra.mxu0 %v553
    %667 = vmatpush.msra.mxu0 %v551
    %668 = vmatpush.msra.mxu0 %v547
    %669 = vmatpush.msra.mxu0 %v545
    %670 = vmatpush.msra.mxu0 %v541
    %671 = vmatpush.msra.mxu0 %v540
    %672 = vmatmul.f32.gmra.mxu0 %v651
    %v673 = vpop.f32.mrf.mxu0
    %v674 = vadd.f32 0.0, %v673
    %675 = vmatmul.f32.gmra.mxu0 %v654
    %v676 = vpop.f32.mrf.mxu0
    %v677 = vadd.f32 0.0, %v676
    %678 = vdwg.mxu0
    %681 = vrot.lane.b32.xlu0 %v616, 8
    %v682 = vpop.permute.xlu0 %681
    %683 = vrot.lane.b32.xlu0 %v619, 8
    %v684 = vpop.permute.xlu0 %683
    %689 = vrot.lane.b32.xlu0 %v645, 16
    %v690 = vpop.permute.xlu0 %689
    %691 = vrot.lane.b32.xlu0 %v648, 16
    %v692 = vpop.permute.xlu0 %691
    %697 = vrot.lane.b32.xlu0 %v674, 24
    %v698 = vpop.permute.xlu0 %697
    %699 = vrot.lane.b32.xlu0 %v677, 24
    %v700 = vpop.permute.xlu0 %699
    %vm703 = vcmask 64512
    %v704 = vsel %vm703, %v587, %v682
    %v705 = vsel %vm703, %v590, %v684
    %v706 = vsel %vm365, %v704, %v690
    %v707 = vsel %vm365, %v705, %v692
    %vm708 = vcmask 195584
    %v709 = vsel %vm708, %v706, %v698
    %v710 = vsel %vm708, %v707, %v700
    %v712 = vsel %vm224, %v709, 0
    %v715 = vsel %vm224, %v710, 0
    %717 = vmatpush.msra.mxu0 0.0
    %718 = vmatpush.msra.mxu0 0.0
    %719 = vmatpush.msra.mxu0 0.0
    %720 = vmatpush.msra.mxu0 0.0
    %721 = vmatpush.msra.mxu0 0.0
    %722 = vmatpush.msra.mxu0 0.0
    %723 = vmatpush.msra.mxu0 0.0
    %724 = vmatpush.msra.mxu0 0.0
    %725 = vmatpush.msra.mxu0 0.0
    %726 = vmatpush.msra.mxu0 0.0
    %727 = vmatpush.msra.mxu0 0.0
    %728 = vmatpush.msra.mxu0 0.0
    %729 = vmatpush.msra.mxu0 %v199
    %730 = vmatpush.msra.mxu0 %v198
    %731 = vmatpush.msra.mxu0 %v197
    %732 = vmatpush.msra.mxu0 %v196
    %733 = vmatmul.f32.gmra.mxu0 %v712
    %v734 = vpop.f32.mrf.mxu0
    %v735 = vadd.f32 0.0, %v734
    %736 = vmatmul.f32.gmra.mxu0 %v715
    %v737 = vpop.f32.mrf.mxu0
    %v738 = vadd.f32 0.0, %v737
    %739 = vdwg.mxu0
    %v740 = vadd.f32 %v187, %v735
    %v741 = vadd.f32 %v190, %v738
    %v742 = vmul.f32 %v740, %v740
    %v743 = vmul.f32 %v741, %v741
    %v744 = vsel %vm224, %v742, 0.0
    %745 = vadd.xlane.f32.xlu0 %v744
    %v746 = vpop.xlane.xlu0 %745
    %v747 = vsel %vm224, %v743, 0.0
    %748 = vadd.xlane.f32.xlu0 %v747
    %v749 = vpop.xlane.xlu0 %748
    %v750 = vmul.f32 %v746, %v237
    %v751 = vmul.f32 %v749, %v237
    %v752 = vadd.f32 %v750, 1e-05
    %v753 = vadd.f32 %v751, 1e-05
    %v754 = vrsqrt.pop %v752
    %v755 = vmul.f32 %v754, %v752
    %v756 = vmul.f32 %v755, %v754
    %v757 = vmul.f32 0.5, %v756
    %v758 = vsub.f32 1.5, %v757
    %v759 = vmul.f32 %v754, %v758
    %vm760 = vweird.f32 %v752
    %vm761 = vweird.f32 %v754
    %vm762 = vmor %vm760, %vm761
    %v763 = vsel %vm762, %v754, %v759
    %v764 = vrsqrt.pop %v753
    %v765 = vmul.f32 %v764, %v753
    %v766 = vmul.f32 %v765, %v764
    %v767 = vmul.f32 0.5, %v766
    %v768 = vsub.f32 1.5, %v767
    %v769 = vmul.f32 %v764, %v768
    %vm770 = vweird.f32 %v753
    %vm771 = vweird.f32 %v764
    %vm772 = vmor %vm770, %vm771
    %v773 = vsel %vm772, %v764, %v769
    %v774 = vmul.f32 %v740, %v763
    %v775 = vmul.f32 %v741, %v773
    %v776 = vperm.slane %v221, 0
    %v777 = vmul.f32 %v774, %v776
    %v778 = vmul.f32 %v775, %v776
    %v780 = vsel %vm224, %v777, 0
    %v783 = vsel %vm224, %v778, 0
    %785 = vmatpush.msra.mxu0 0.0
    %786 = vmatpush.msra.mxu0 0.0
    %787 = vmatpush.msra.mxu0 0.0
    %788 = vmatpush.msra.mxu0 0.0
    %789 = vmatpush.msra.mxu0 0.0
    %790 = vmatpush.msra.mxu0 0.0
    %791 = vmatpush.msra.mxu0 0.0
    %792 = vmatpush.msra.mxu0 0.0
    %793 = vmatpush.msra.mxu0 0.0
    %794 = vmatpush.msra.mxu0 0.0
    %795 = vmatpush.msra.mxu0 0.0
    %796 = vmatpush.msra.mxu0 0.0
    %797 = vmatpush.msra.mxu0 %v206
    %798 = vmatpush.msra.mxu0 %v204
    %799 = vmatpush.msra.mxu0 %v202
    %800 = vmatpush.msra.mxu0 %v200
    %801 = vmatmul.f32.gmra.mxu0 %v780
    %v802 = vpop.f32.mrf.mxu0
    %v803 = vadd.f32 0.0, %v802
    %804 = vmatmul.f32.gmra.mxu0 %v783
    %v805 = vpop.f32.mrf.mxu0
    %v806 = vadd.f32 0.0, %v805
    %807 = vdwg.mxu0
    %808 = vmatpush.msra.mxu0 0.0
    %809 = vmatpush.msra.mxu0 0.0
    %810 = vmatpush.msra.mxu0 0.0
    %811 = vmatpush.msra.mxu0 0.0
    %812 = vmatpush.msra.mxu0 0.0
    %813 = vmatpush.msra.mxu0 0.0
    %814 = vmatpush.msra.mxu0 0.0
    %815 = vmatpush.msra.mxu0 0.0
    %816 = vmatpush.msra.mxu0 0.0
    %817 = vmatpush.msra.mxu0 0.0
    %818 = vmatpush.msra.mxu0 0.0
    %819 = vmatpush.msra.mxu0 0.0
    %820 = vmatpush.msra.mxu0 %v207
    %821 = vmatpush.msra.mxu0 %v205
    %822 = vmatpush.msra.mxu0 %v203
    %823 = vmatpush.msra.mxu0 %v201
    %824 = vmatmul.f32.gmra.mxu0 %v780
    %v825 = vpop.f32.mrf.mxu0
    %v826 = vadd.f32 0.0, %v825
    %827 = vmatmul.f32.gmra.mxu0 %v783
    %v828 = vpop.f32.mrf.mxu0
    %v829 = vadd.f32 0.0, %v828
    %830 = vdwg.mxu0
    %v831 = vsub.f32 0.0, %v803
    %v832 = vsub.f32 0.0, %v806
    %v833 = vmul.f32 %v831, 1.442695
    %v834 = vpow.pop %v833
    %v835 = vmul.f32 %v832, 1.442695
    %v836 = vpow.pop %v835
    %v837 = vadd.f32 %v834, 1.0
    %v838 = vadd.f32 %v836, 1.0
    %v839 = vrcp.pop %v837
    %v840 = vrcp.pop %v838
    %v841 = vmul.f32 %v803, %v839
    %v842 = vmul.f32 %v806, %v840
    %847 = vrot.lane.b32.xlu0 %v803, 32
    %v848 = vpop.permute.xlu0 %847
    %849 = vrot.lane.b32.xlu0 %v826, 32
    %v850 = vpop.permute.xlu0 %849
    %851 = vrot.lane.b32.xlu0 %v806, 32
    %v852 = vpop.permute.xlu0 %851
    %853 = vrot.lane.b32.xlu0 %v829, 32
    %v854 = vpop.permute.xlu0 %853
    %v855 = vsel %vm224, %v848, %v850
    %v856 = vsel %vm224, %v852, %v854
    %v859 = vmul.f32 %v841, %v855
    %v860 = vmul.f32 %v842, %v856
    %vm861 = vcmask 785408
    %v863 = vsel %vm861, %v859, 0
    %v866 = vsel %vm861, %v860, 0
    %868 = vmatpush.msra.mxu0 0.0
    %869 = vmatpush.msra.mxu0 0.0
    %870 = vmatpush.msra.mxu0 0.0
    %871 = vmatpush.msra.mxu0 0.0
    %872 = vmatpush.msra.mxu0 %v219
    %873 = vmatpush.msra.mxu0 %v218
    %874 = vmatpush.msra.mxu0 %v217
    %875 = vmatpush.msra.mxu0 %v216
    %876 = vmatpush.msra.mxu0 %v215
    %877 = vmatpush.msra.mxu0 %v214
    %878 = vmatpush.msra.mxu0 %v213
    %879 = vmatpush.msra.mxu0 %v212
    %880 = vmatpush.msra.mxu0 %v211
    %881 = vmatpush.msra.mxu0 %v210
    %882 = vmatpush.msra.mxu0 %v209
    %883 = vmatpush.msra.mxu0 %v208
    %884 = vmatmul.f32.gmra.mxu0 %v863
    %v885 = vpop.f32.mrf.mxu0
    %v886 = vadd.f32 0.0, %v885
    %887 = vmatmul.f32.gmra.mxu0 %v866
    %v888 = vpop.f32.mrf.mxu0
    %v889 = vadd.f32 0.0, %v888
    %890 = vdwg.mxu0
    %v891 = vadd.f32 %v740, %v886
    %v892 = vadd.f32 %v741, %v889
    %v893 = vld [vmem:[#allocation2 + $0xc0] sm:$0xff]
    %v894 = vld [vmem:[#allocation2 + $0xd0] sm:$0xff]
    %v895 = vld [vmem:[#allocation2 + $0xe0] sm:$0xff]
    %v896 = vld [vmem:[#allocation2 + $0xf0] sm:$0xff]
    %v897 = vld [vmem:[#allocation2 + $0x100] sm:$0xff]
    %v898 = vld [vmem:[#allocation2 + $0x110] sm:$0xff]
    %v899 = vld [vmem:[#allocation2 + $0x120] sm:$0xff]
    %v900 = vld [vmem:[#allocation2 + $0x130] sm:$0xff]
    %v901 = vld [vmem:[#allocation2 + $0x140] sm:$0xff]
    %v902 = vld [vmem:[#allocation2 + $0x148] sm:$0xff]
    %v903 = vld [vmem:[#allocation2 + $0x150] sm:$0xff]
    %v904 = vld [vmem:[#allocation2 + $0x158] sm:$0xff]
    %v905 = vld [vmem:[#allocation2 + $0x160] sm:$0xff]
    %v906 = vld [vmem:[#allocation2 + $0x168] sm:$0xff]
    %v907 = vld [vmem:[#allocation2 + $0x170] sm:$0xff]
    %v908 = vld [vmem:[#allocation2 + $0x178] sm:$0xff]
    %v909 = vld [vmem:[%s2 + $0x160] sm:$0xff]
    %v910 = vld [vmem:[%s2 + $0x168] sm:$0xff]
    %v911 = vld [vmem:[%s2 + $0x170] sm:$0xff]
    %v912 = vld [vmem:[%s2 + $0x178] sm:$0xff]
    %v913 = vld [vmem:[%s2 + $0x180] sm:$0xff]
    %v914 = vld [vmem:[%s2 + $0x188] sm:$0xff]
    %v915 = vld [vmem:[%s2 + $0x190] sm:$0xff]
    %v916 = vld [vmem:[%s2 + $0x198] sm:$0xff]
    %v917 = vld [vmem:[%s2 + $0x1a0] sm:$0xff]
    %v918 = vld [vmem:[%s2 + $0x1a8] sm:$0xff]
    %v919 = vld [vmem:[%s2 + $0x1b0] sm:$0xff]
    %v920 = vld [vmem:[%s2 + $0x1b8] sm:$0xff]
    %v921 = vld [vmem:[%s2 + $0x1c2] sm:$0x1]
    %v922 = vld [vmem:[%s2 + $0x1c3] sm:$0x1]
    %v923 = vmul.f32 %v891, %v891
    %v924 = vmul.f32 %v892, %v892
    %v925 = vsel %vm224, %v923, 0.0
    %926 = vadd.xlane.f32.xlu0 %v925
    %v927 = vpop.xlane.xlu0 %926
    %v928 = vsel %vm224, %v924, 0.0
    %929 = vadd.xlane.f32.xlu0 %v928
    %v930 = vpop.xlane.xlu0 %929
    %v931 = vmul.f32 %v927, %v237
    %v932 = vmul.f32 %v930, %v237
    %v933 = vadd.f32 %v931, 1e-05
    %v934 = vadd.f32 %v932, 1e-05
    %v935 = vrsqrt.pop %v933
    %v936 = vmul.f32 %v935, %v933
    %v937 = vmul.f32 %v936, %v935
    %v938 = vmul.f32 0.5, %v937
    %v939 = vsub.f32 1.5, %v938
    %v940 = vmul.f32 %v935, %v939
    %vm941 = vweird.f32 %v933
    %vm942 = vweird.f32 %v935
    %vm943 = vmor %vm941, %vm942
    %v944 = vsel %vm943, %v935, %v940
    %v945 = vrsqrt.pop %v934
    %v946 = vmul.f32 %v945, %v934
    %v947 = vmul.f32 %v946, %v945
    %v948 = vmul.f32 0.5, %v947
    %v949 = vsub.f32 1.5, %v948
    %v950 = vmul.f32 %v945, %v949
    %vm951 = vweird.f32 %v934
    %vm952 = vweird.f32 %v945
    %vm953 = vmor %vm951, %vm952
    %v954 = vsel %vm953, %v945, %v950
    %v955 = vmul.f32 %v891, %v944
    %v956 = vmul.f32 %v892, %v954
    %v957 = vperm.slane %v921, 0
    %v958 = vmul.f32 %v955, %v957
    %v959 = vmul.f32 %v956, %v957
    %v961 = vsel %vm224, %v958, 0
    %v964 = vsel %vm224, %v959, 0
    %966 = vmatpush.msra.mxu0 0.0
    %967 = vmatpush.msra.mxu0 0.0
    %968 = vmatpush.msra.mxu0 0.0
    %969 = vmatpush.msra.mxu0 0.0
    %970 = vmatpush.msra.mxu0 0.0
    %971 = vmatpush.msra.mxu0 0.0
    %972 = vmatpush.msra.mxu0 0.0
    %973 = vmatpush.msra.mxu0 0.0
    %974 = vmatpush.msra.mxu0 0.0
    %975 = vmatpush.msra.mxu0 0.0
    %976 = vmatpush.msra.mxu0 0.0
    %977 = vmatpush.msra.mxu0 0.0
    %978 = vmatpush.msra.mxu0 %v896
    %979 = vmatpush.msra.mxu0 %v895
    %980 = vmatpush.msra.mxu0 %v894
    %981 = vmatpush.msra.mxu0 %v893
    %982 = vmatmul.f32.gmra.mxu0 %v961
    %v983 = vpop.f32.mrf.mxu0
    %v984 = vadd.f32 0.0, %v983
    %985 = vmatmul.f32.gmra.mxu0 %v964
    %v986 = vpop.f32.mrf.mxu0
    %v987 = vadd.f32 0.0, %v986
    %988 = vdwg.mxu0
    %v989 = vmul.f32 %v984, %v81
    %v990 = vmul.f32 %v987, %v81
    %v992 = vsel %vm298, %v984, 0
    %v995 = vsel %vm298, %v987, 0
    %997 = vmatpush.msra.mxu0 0.0
    %998 = vmatpush.msra.mxu0 0.0
    %999 = vmatpush.msra.mxu0 0.0
    %1000 = vmatpush.msra.mxu0 0.0
    %1001 = vmatpush.msra.mxu0 0.0
    %1002 = vmatpush.msra.mxu0 0.0
    %1003 = vmatpush.msra.mxu0 0.0
    %1004 = vmatpush.msra.mxu0 0.0
    %1005 = vmatpush.msra.mxu0 0.0
    %1006 = vmatpush.msra.mxu0 0.0
    %1007 = vmatpush.msra.mxu0 %v80
    %1008 = vmatpush.msra.mxu0 %v79
    %1009 = vmatpush.msra.mxu0 %v78
    %1010 = vmatpush.msra.mxu0 %v77
    %1011 = vmatpush.msra.mxu0 %v76
    %1012 = vmatpush.msra.mxu0 %v75
    %1013 = vmatmul.f32.gmra.mxu0 %v992
    %v1014 = vpop.f32.mrf.mxu0
    %v1015 = vadd.f32 0.0, %v1014
    %1016 = vmatmul.f32.gmra.mxu0 %v995
    %v1017 = vpop.f32.mrf.mxu0
    %v1018 = vadd.f32 0.0, %v1017
    %1019 = vdwg.mxu0
    %v1020 = vmul.f32 %v1015, %v82
    %v1021 = vmul.f32 %v1018, %v82
    %v1022 = vadd.f32 %v989, %v1020
    %v1023 = vadd.f32 %v990, %v1021
    %v1025 = vsel %vm224, %v1022, 0
    %v1028 = vsel %vm224, %v1023, 0
    %1030 = vmatpush.msra.mxu0 0.0
    %1031 = vmatpush.msra.mxu0 0.0
    %1032 = vmatpush.msra.mxu0 0.0
    %1033 = vmatpush.msra.mxu0 0.0
    %1034 = vmatpush.msra.mxu0 0.0
    %1035 = vmatpush.msra.mxu0 0.0
    %1036 = vmatpush.msra.mxu0 0.0
    %1037 = vmatpush.msra.mxu0 0.0
    %1038 = vmatpush.msra.mxu0 0.0
    %1039 = vmatpush.msra.mxu0 0.0
    %1040 = vmatpush.msra.mxu0 0.0
    %1041 = vmatpush.msra.mxu0 0.0
    %1042 = vmatpush.msra.mxu0 %v36
    %1043 = vmatpush.msra.mxu0 %v35
    %1044 = vmatpush.msra.mxu0 %v34
    %1045 = vmatpush.msra.mxu0 %v33
    %1046 = vmatmul.f32.gmra.mxu0 %v1025
    %v1047 = vpop.f32.mrf.mxu0
    %v1048 = vadd.f32 0.0, %v1047
    %1049 = vmatmul.f32.gmra.mxu0 %v1028
    %v1050 = vpop.f32.mrf.mxu0
    %v1051 = vadd.f32 0.0, %v1050
    %1052 = vdwg.mxu0
    %1053 = vrot.lane.b32.xlu0 %v1022, 96
    %v1054 = vpop.permute.xlu0 %1053
    %1055 = vrot.lane.b32.xlu0 %v1023, 96
    %v1056 = vpop.permute.xlu0 %1055
    %v1057 = vsel %vm365, %v1054, 0
    %v1059 = vsel %vm365, %v1056, 0
    %1061 = vmatpush.msra.mxu0 0.0
    %1062 = vmatpush.msra.mxu0 0.0
    %1063 = vmatpush.msra.mxu0 0.0
    %1064 = vmatpush.msra.mxu0 0.0
    %1065 = vmatpush.msra.mxu0 0.0
    %1066 = vmatpush.msra.mxu0 0.0
    %1067 = vmatpush.msra.mxu0 0.0
    %1068 = vmatpush.msra.mxu0 0.0
    %1069 = vmatpush.msra.mxu0 0.0
    %1070 = vmatpush.msra.mxu0 0.0
    %1071 = vmatpush.msra.mxu0 0.0
    %1072 = vmatpush.msra.mxu0 0.0
    %1073 = vmatpush.msra.mxu0 0.0
    %1074 = vmatpush.msra.mxu0 0.0
    %1075 = vmatpush.msra.mxu0 %v38
    %1076 = vmatpush.msra.mxu0 %v37
    %1077 = vmatmul.f32.gmra.mxu0 %v1057
    %v1078 = vpop.f32.mrf.mxu0
    %v1079 = vadd.f32 0.0, %v1078
    %1080 = vmatmul.f32.gmra.mxu0 %v1059
    %v1081 = vpop.f32.mrf.mxu0
    %v1082 = vadd.f32 0.0, %v1081
    %1083 = vdwg.mxu0
    %1084 = vrot.lane.b32.xlu0 %v984, 80
    %v1085 = vpop.permute.xlu0 %1084
    %1086 = vrot.lane.b32.xlu0 %v987, 80
    %v1087 = vpop.permute.xlu0 %1086
    %v1088 = vsel %vm365, %v1085, 0
    %v1090 = vsel %vm365, %v1087, 0
    %1092 = vmatpush.msra.mxu0 0.0
    %1093 = vmatpush.msra.mxu0 0.0
    %1094 = vmatpush.msra.mxu0 0.0
    %1095 = vmatpush.msra.mxu0 0.0
    %1096 = vmatpush.msra.mxu0 0.0
    %1097 = vmatpush.msra.mxu0 0.0
    %1098 = vmatpush.msra.mxu0 0.0
    %1099 = vmatpush.msra.mxu0 0.0
    %1100 = vmatpush.msra.mxu0 0.0
    %1101 = vmatpush.msra.mxu0 0.0
    %1102 = vmatpush.msra.mxu0 0.0
    %1103 = vmatpush.msra.mxu0 0.0
    %1104 = vmatpush.msra.mxu0 0.0
    %1105 = vmatpush.msra.mxu0 0.0
    %1106 = vmatpush.msra.mxu0 %v38
    %1107 = vmatpush.msra.mxu0 %v37
    %1108 = vmatmul.f32.gmra.mxu0 %v1088
    %v1109 = vpop.f32.mrf.mxu0
    %v1110 = vadd.f32 0.0, %v1109
    %1111 = vmatmul.f32.gmra.mxu0 %v1090
    %v1112 = vpop.f32.mrf.mxu0
    %v1113 = vadd.f32 0.0, %v1112
    %1114 = vdwg.mxu0
    %v1115 = vmul.f32 %v1048, %v1079
    %v1116 = vmul.f32 %v1051, %v1082
    %1117 = vmatpush.msra.mxu0 %v56
    %1118 = vmatpush.msra.mxu0 %v55
    %1119 = vmatpush.msra.mxu0 %v54
    %1120 = vmatpush.msra.mxu0 %v53
    %1121 = vmatpush.msra.mxu0 %v52
    %1122 = vmatpush.msra.mxu0 %v51
    %1123 = vmatpush.msra.mxu0 %v50
    %1124 = vmatpush.msra.mxu0 %v49
    %1125 = vmatpush.msra.mxu0 %v48
    %1126 = vmatpush.msra.mxu0 %v47
    %1127 = vmatpush.msra.mxu0 %v46
    %1128 = vmatpush.msra.mxu0 %v45
    %1129 = vmatpush.msra.mxu0 %v44
    %1130 = vmatpush.msra.mxu0 %v43
    %1131 = vmatpush.msra.mxu0 %v42
    %1132 = vmatpush.msra.mxu0 %v41
    %1133 = vmatmul.f32.gmra.mxu0 %v1115
    %v1134 = vpop.f32.mrf.mxu0
    %v1135 = vadd.f32 0.0, %v1134
    %1136 = vmatmul.f32.gmra.mxu0 %v1116
    %v1137 = vpop.f32.mrf.mxu0
    %v1138 = vadd.f32 0.0, %v1137
    %1139 = vdwg.mxu0
    %v1140 = vsel %vm365, %v1135, -inf
    %1141 = vmax.xlane.f32.xlu0 %v1140
    %v1142 = vpop.xlane.xlu0 %1141
    %v1143 = vsel %vm365, %v1138, -inf
    %1144 = vmax.xlane.f32.xlu0 %v1143
    %v1145 = vpop.xlane.xlu0 %1144
    %v1146 = vsub.f32 %v1135, %v1142
    %v1147 = vsub.f32 %v1138, %v1145
    %v1148 = vmul.f32 %v1146, 1.442695
    %v1149 = vpow.pop %v1148
    %v1150 = vmul.f32 %v1147, 1.442695
    %v1151 = vpow.pop %v1150
    %v1153 = vsel %vm365, %v1149, 0
    %v1156 = vsel %vm365, %v1151, 0
    %1158 = vmatpush.msra.mxu0 0.0
    %1159 = vmatpush.msra.mxu0 0.0
    %1160 = vmatpush.msra.mxu0 0.0
    %1161 = vmatpush.msra.mxu0 0.0
    %1162 = vmatpush.msra.mxu0 0.0
    %1163 = vmatpush.msra.mxu0 0.0
    %1164 = vmatpush.msra.mxu0 0.0
    %1165 = vmatpush.msra.mxu0 0.0
    %1166 = vmatpush.msra.mxu0 0.0
    %1167 = vmatpush.msra.mxu0 0.0
    %1168 = vmatpush.msra.mxu0 0.0
    %1169 = vmatpush.msra.mxu0 0.0
    %1170 = vmatpush.msra.mxu0 0.0
    %1171 = vmatpush.msra.mxu0 0.0
    %1172 = vmatpush.msra.mxu0 %v74
    %1173 = vmatpush.msra.mxu0 %v73
    %1174 = vmatmul.f32.gmra.mxu0 %v1153
    %v1175 = vpop.f32.mrf.mxu0
    %v1176 = vadd.f32 0.0, %v1175
    %1177 = vmatmul.f32.gmra.mxu0 %v1156
    %v1178 = vpop.f32.mrf.mxu0
    %v1179 = vadd.f32 0.0, %v1178
    %1180 = vdwg.mxu0
    %1181 = vmatpush.msra.mxu0 0.0
    %1182 = vmatpush.msra.mxu0 0.0
    %1183 = vmatpush.msra.mxu0 0.0
    %1184 = vmatpush.msra.mxu0 0.0
    %1185 = vmatpush.msra.mxu0 0.0
    %1186 = vmatpush.msra.mxu0 0.0
    %1187 = vmatpush.msra.mxu0 0.0
    %1188 = vmatpush.msra.mxu0 0.0
    %1189 = vmatpush.msra.mxu0 0.0
    %1190 = vmatpush.msra.mxu0 0.0
    %1191 = vmatpush.msra.mxu0 0.0
    %1192 = vmatpush.msra.mxu0 0.0
    %1193 = vmatpush.msra.mxu0 0.0
    %1194 = vmatpush.msra.mxu0 0.0
    %1195 = vmatpush.msra.mxu0 %v40
    %1196 = vmatpush.msra.mxu0 %v39
    %1197 = vmatmul.f32.gmra.mxu0 %v1153
    %v1198 = vpop.f32.mrf.mxu0
    %v1199 = vadd.f32 0.0, %v1198
    %1200 = vmatmul.f32.gmra.mxu0 %v1156
    %v1201 = vpop.f32.mrf.mxu0
    %v1202 = vadd.f32 0.0, %v1201
    %1203 = vdwg.mxu0
    %v1204 = vmul.f32 %v1199, %v1110
    %v1205 = vmul.f32 %v1202, %v1113
    %1206 = vmatpush.msra.mxu0 %v72
    %1207 = vmatpush.msra.mxu0 %v71
    %1208 = vmatpush.msra.mxu0 %v70
    %1209 = vmatpush.msra.mxu0 %v69
    %1210 = vmatpush.msra.mxu0 %v68
    %1211 = vmatpush.msra.mxu0 %v67
    %1212 = vmatpush.msra.mxu0 %v66
    %1213 = vmatpush.msra.mxu0 %v65
    %1214 = vmatpush.msra.mxu0 %v64
    %1215 = vmatpush.msra.mxu0 %v63
    %1216 = vmatpush.msra.mxu0 %v62
    %1217 = vmatpush.msra.mxu0 %v61
    %1218 = vmatpush.msra.mxu0 %v60
    %1219 = vmatpush.msra.mxu0 %v59
    %1220 = vmatpush.msra.mxu0 %v58
    %1221 = vmatpush.msra.mxu0 %v57
    %1222 = vmatmul.f32.gmra.mxu0 %v1204
    %v1223 = vpop.f32.mrf.mxu0
    %v1224 = vadd.f32 0.0, %v1223
    %1225 = vmatmul.f32.gmra.mxu0 %v1205
    %v1226 = vpop.f32.mrf.mxu0
    %v1227 = vadd.f32 0.0, %v1226
    %1228 = vdwg.mxu0
    %v1229 = vrcp.pop %v1176
    %v1230 = vrcp.pop %v1179
    %v1231 = vmul.f32 %v1224, %v1229
    %v1232 = vmul.f32 %v1227, %v1230
    %1235 = vrot.lane.b32.xlu0 %v1231, 120
    %v1236 = vpop.permute.xlu0 %1235
    %1237 = vrot.lane.b32.xlu0 %v1232, 120
    %v1238 = vpop.permute.xlu0 %1237
    %1241 = vrot.lane.b32.xlu0 %v1231, 112
    %v1242 = vpop.permute.xlu0 %1241
    %1243 = vrot.lane.b32.xlu0 %v1232, 112
    %v1244 = vpop.permute.xlu0 %1243
    %1247 = vrot.lane.b32.xlu0 %v1231, 104
    %v1248 = vpop.permute.xlu0 %1247
    %1249 = vrot.lane.b32.xlu0 %v1232, 104
    %v1250 = vpop.permute.xlu0 %1249
    %1253 = vmatpush.msra.mxu0 0.0
    %1254 = vmatpush.msra.mxu0 0.0
    %1255 = vmatpush.msra.mxu0 0.0
    %1256 = vmatpush.msra.mxu0 0.0
    %1257 = vmatpush.msra.mxu0 0.0
    %1258 = vmatpush.msra.mxu0 0.0
    %1259 = vmatpush.msra.mxu0 0.0
    %1260 = vmatpush.msra.mxu0 0.0
    %1261 = vmatpush.msra.mxu0 %v1250
    %1262 = vmatpush.msra.mxu0 %v1248
    %1263 = vmatpush.msra.mxu0 %v1244
    %1264 = vmatpush.msra.mxu0 %v1242
    %1265 = vmatpush.msra.mxu0 %v1238
    %1266 = vmatpush.msra.mxu0 %v1236
    %1267 = vmatpush.msra.mxu0 %v1232
    %1268 = vmatpush.msra.mxu0 %v1231
    %1269 = vmatmul.f32.gmra.mxu0 %v564
    %v1270 = vpop.f32.mrf.mxu0
    %v1271 = vadd.f32 0.0, %v1270
    %1272 = vmatmul.f32.gmra.mxu0 %v567
    %v1273 = vpop.f32.mrf.mxu0
    %v1274 = vadd.f32 0.0, %v1273
    %1275 = vdwg.mxu0
    %1276 = vmatpush.msra.mxu0 0.0
    %1277 = vmatpush.msra.mxu0 0.0
    %1278 = vmatpush.msra.mxu0 0.0
    %1279 = vmatpush.msra.mxu0 0.0
    %1280 = vmatpush.msra.mxu0 0.0
    %1281 = vmatpush.msra.mxu0 0.0
    %1282 = vmatpush.msra.mxu0 0.0
    %1283 = vmatpush.msra.mxu0 0.0
    %1284 = vmatpush.msra.mxu0 %v1250
    %1285 = vmatpush.msra.mxu0 %v1248
    %1286 = vmatpush.msra.mxu0 %v1244
    %1287 = vmatpush.msra.mxu0 %v1242
    %1288 = vmatpush.msra.mxu0 %v1238
    %1289 = vmatpush.msra.mxu0 %v1236
    %1290 = vmatpush.msra.mxu0 %v1232
    %1291 = vmatpush.msra.mxu0 %v1231
    %1292 = vmatmul.f32.gmra.mxu0 %v593
    %v1293 = vpop.f32.mrf.mxu0
    %v1294 = vadd.f32 0.0, %v1293
    %1295 = vmatmul.f32.gmra.mxu0 %v596
    %v1296 = vpop.f32.mrf.mxu0
    %v1297 = vadd.f32 0.0, %v1296
    %1298 = vdwg.mxu0
    %1299 = vmatpush.msra.mxu0 0.0
    %1300 = vmatpush.msra.mxu0 0.0
    %1301 = vmatpush.msra.mxu0 0.0
    %1302 = vmatpush.msra.mxu0 0.0
    %1303 = vmatpush.msra.mxu0 0.0
    %1304 = vmatpush.msra.mxu0 0.0
    %1305 = vmatpush.msra.mxu0 0.0
    %1306 = vmatpush.msra.mxu0 0.0
    %1307 = vmatpush.msra.mxu0 %v1250
    %1308 = vmatpush.msra.mxu0 %v1248
    %1309 = vmatpush.msra.mxu0 %v1244
    %1310 = vmatpush.msra.mxu0 %v1242
    %1311 = vmatpush.msra.mxu0 %v1238
    %1312 = vmatpush.msra.mxu0 %v1236
    %1313 = vmatpush.msra.mxu0 %v1232
    %1314 = vmatpush.msra.mxu0 %v1231
    %1315 = vmatmul.f32.gmra.mxu0 %v622
    %v1316 = vpop.f32.mrf.mxu0
    %v1317 = vadd.f32 0.0, %v1316
    %1318 = vmatmul.f32.gmra.mxu0 %v625
    %v1319 = vpop.f32.mrf.mxu0
    %v1320 = vadd.f32 0.0, %v1319
    %1321 = vdwg.mxu0
    %1322 = vmatpush.msra.mxu0 0.0
    %1323 = vmatpush.msra.mxu0 0.0
    %1324 = vmatpush.msra.mxu0 0.0
    %1325 = vmatpush.msra.mxu0 0.0
    %1326 = vmatpush.msra.mxu0 0.0
    %1327 = vmatpush.msra.mxu0 0.0
    %1328 = vmatpush.msra.mxu0 0.0
    %1329 = vmatpush.msra.mxu0 0.0
    %1330 = vmatpush.msra.mxu0 %v1250
    %1331 = vmatpush.msra.mxu0 %v1248
    %1332 = vmatpush.msra.mxu0 %v1244
    %1333 = vmatpush.msra.mxu0 %v1242
    %1334 = vmatpush.msra.mxu0 %v1238
    %1335 = vmatpush.msra.mxu0 %v1236
    %1336 = vmatpush.msra.mxu0 %v1232
    %1337 = vmatpush.msra.mxu0 %v1231
    %1338 = vmatmul.f32.gmra.mxu0 %v651
    %v1339 = vpop.f32.mrf.mxu0
    %v1340 = vadd.f32 0.0, %v1339
    %1341 = vmatmul.f32.gmra.mxu0 %v654
    %v1342 = vpop.f32.mrf.mxu0
    %v1343 = vadd.f32 0.0, %v1342
    %1344 = vdwg.mxu0
    %1347 = vrot.lane.b32.xlu0 %v1294, 8
    %v1348 = vpop.permute.xlu0 %1347
    %1349 = vrot.lane.b32.xlu0 %v1297, 8
    %v1350 = vpop.permute.xlu0 %1349
    %1355 = vrot.lane.b32.xlu0 %v1317, 16
    %v1356 = vpop.permute.xlu0 %1355
    %1357 = vrot.lane.b32.xlu0 %v1320, 16
    %v1358 = vpop.permute.xlu0 %1357
    %1363 = vrot.lane.b32.xlu0 %v1340, 24
    %v1364 = vpop.permute.xlu0 %1363
    %1365 = vrot.lane.b32.xlu0 %v1343, 24
    %v1366 = vpop.permute.xlu0 %1365
    %v1369 = vsel %vm703, %v1271, %v1348
    %v1370 = vsel %vm703, %v1274, %v1350
    %v1371 = vsel %vm365, %v1369, %v1356
    %v1372 = vsel %vm365, %v1370, %v1358
    %v1373 = vsel %vm708, %v1371, %v1364
    %v1374 = vsel %vm708, %v1372, %v1366
    %v1376 = vsel %vm224, %v1373, 0
    %v1379 = vsel %vm224, %v1374, 0
    %1381 = vmatpush.msra.mxu0 0.0
    %1382 = vmatpush.msra.mxu0 0.0
    %1383 = vmatpush.msra.mxu0 0.0
    %1384 = vmatpush.msra.mxu0 0.0
    %1385 = vmatpush.msra.mxu0 0.0
    %1386 = vmatpush.msra.mxu0 0.0
    %1387 = vmatpush.msra.mxu0 0.0
    %1388 = vmatpush.msra.mxu0 0.0
    %1389 = vmatpush.msra.mxu0 0.0
    %1390 = vmatpush.msra.mxu0 0.0
    %1391 = vmatpush.msra.mxu0 0.0
    %1392 = vmatpush.msra.mxu0 0.0
    %1393 = vmatpush.msra.mxu0 %v900
    %1394 = vmatpush.msra.mxu0 %v899
    %1395 = vmatpush.msra.mxu0 %v898
    %1396 = vmatpush.msra.mxu0 %v897
    %1397 = vmatmul.f32.gmra.mxu0 %v1376
    %v1398 = vpop.f32.mrf.mxu0
    %v1399 = vadd.f32 0.0, %v1398
    %1400 = vmatmul.f32.gmra.mxu0 %v1379
    %v1401 = vpop.f32.mrf.mxu0
    %v1402 = vadd.f32 0.0, %v1401
    %1403 = vdwg.mxu0
    %v1404 = vadd.f32 %v891, %v1399
    %v1405 = vadd.f32 %v892, %v1402
    %v1406 = vmul.f32 %v1404, %v1404
    %v1407 = vmul.f32 %v1405, %v1405
    %v1408 = vsel %vm224, %v1406, 0.0
    %1409 = vadd.xlane.f32.xlu0 %v1408
    %v1410 = vpop.xlane.xlu0 %1409
    %v1411 = vsel %vm224, %v1407, 0.0
    %1412 = vadd.xlane.f32.xlu0 %v1411
    %v1413 = vpop.xlane.xlu0 %1412
    %v1414 = vmul.f32 %v1410, %v237
    %v1415 = vmul.f32 %v1413, %v237
    %v1416 = vadd.f32 %v1414, 1e-05
    %v1417 = vadd.f32 %v1415, 1e-05
    %v1418 = vrsqrt.pop %v1416
    %v1419 = vmul.f32 %v1418, %v1416
    %v1420 = vmul.f32 %v1419, %v1418
    %v1421 = vmul.f32 0.5, %v1420
    %v1422 = vsub.f32 1.5, %v1421
    %v1423 = vmul.f32 %v1418, %v1422
    %vm1424 = vweird.f32 %v1416
    %vm1425 = vweird.f32 %v1418
    %vm1426 = vmor %vm1424, %vm1425
    %v1427 = vsel %vm1426, %v1418, %v1423
    %v1428 = vrsqrt.pop %v1417
    %v1429 = vmul.f32 %v1428, %v1417
    %v1430 = vmul.f32 %v1429, %v1428
    %v1431 = vmul.f32 0.5, %v1430
    %v1432 = vsub.f32 1.5, %v1431
    %v1433 = vmul.f32 %v1428, %v1432
    %vm1434 = vweird.f32 %v1417
    %vm1435 = vweird.f32 %v1428
    %vm1436 = vmor %vm1434, %vm1435
    %v1437 = vsel %vm1436, %v1428, %v1433
    %v1438 = vmul.f32 %v1404, %v1427
    %v1439 = vmul.f32 %v1405, %v1437
    %v1440 = vperm.slane %v922, 0
    %v1441 = vmul.f32 %v1438, %v1440
    %v1442 = vmul.f32 %v1439, %v1440
    %v1444 = vsel %vm224, %v1441, 0
    %v1447 = vsel %vm224, %v1442, 0
    %1449 = vmatpush.msra.mxu0 0.0
    %1450 = vmatpush.msra.mxu0 0.0
    %1451 = vmatpush.msra.mxu0 0.0
    %1452 = vmatpush.msra.mxu0 0.0
    %1453 = vmatpush.msra.mxu0 0.0
    %1454 = vmatpush.msra.mxu0 0.0
    %1455 = vmatpush.msra.mxu0 0.0
    %1456 = vmatpush.msra.mxu0 0.0
    %1457 = vmatpush.msra.mxu0 0.0
    %1458 = vmatpush.msra.mxu0 0.0
    %1459 = vmatpush.msra.mxu0 0.0
    %1460 = vmatpush.msra.mxu0 0.0
    %1461 = vmatpush.msra.mxu0 %v907
    %1462 = vmatpush.msra.mxu0 %v905
    %1463 = vmatpush.msra.mxu0 %v903
    %1464 = vmatpush.msra.mxu0 %v901
    %1465 = vmatmul.f32.gmra.mxu0 %v1444
    %v1466 = vpop.f32.mrf.mxu0
    %v1467 = vadd.f32 0.0, %v1466
    %1468 = vmatmul.f32.gmra.mxu0 %v1447
    %v1469 = vpop.f32.mrf.mxu0
    %v1470 = vadd.f32 0.0, %v1469
    %1471 = vdwg.mxu0
    %1472 = vmatpush.msra.mxu0 0.0
    %1473 = vmatpush.msra.mxu0 0.0
    %1474 = vmatpush.msra.mxu0 0.0
    %1475 = vmatpush.msra.mxu0 0.0
    %1476 = vmatpush.msra.mxu0 0.0
    %1477 = vmatpush.msra.mxu0 0.0
    %1478 = vmatpush.msra.mxu0 0.0
    %1479 = vmatpush.msra.mxu0 0.0
    %1480 = vmatpush.msra.mxu0 0.0
    %1481 = vmatpush.msra.mxu0 0.0
    %1482 = vmatpush.msra.mxu0 0.0
    %1483 = vmatpush.msra.mxu0 0.0
    %1484 = vmatpush.msra.mxu0 %v908
    %1485 = vmatpush.msra.mxu0 %v906
    %1486 = vmatpush.msra.mxu0 %v904
    %1487 = vmatpush.msra.mxu0 %v902
    %1488 = vmatmul.f32.gmra.mxu0 %v1444
    %v1489 = vpop.f32.mrf.mxu0
    %v1490 = vadd.f32 0.0, %v1489
    %1491 = vmatmul.f32.gmra.mxu0 %v1447
    %v1492 = vpop.f32.mrf.mxu0
    %v1493 = vadd.f32 0.0, %v1492
    %1494 = vdwg.mxu0
    %v1495 = vsub.f32 0.0, %v1467
    %v1496 = vsub.f32 0.0, %v1470
    %v1497 = vmul.f32 %v1495, 1.442695
    %v1498 = vpow.pop %v1497
    %v1499 = vmul.f32 %v1496, 1.442695
    %v1500 = vpow.pop %v1499
    %v1501 = vadd.f32 %v1498, 1.0
    %v1502 = vadd.f32 %v1500, 1.0
    %v1503 = vrcp.pop %v1501
    %v1504 = vrcp.pop %v1502
    %v1505 = vmul.f32 %v1467, %v1503
    %v1506 = vmul.f32 %v1470, %v1504
    %1511 = vrot.lane.b32.xlu0 %v1467, 32
    %v1512 = vpop.permute.xlu0 %1511
    %1513 = vrot.lane.b32.xlu0 %v1490, 32
    %v1514 = vpop.permute.xlu0 %1513
    %1515 = vrot.lane.b32.xlu0 %v1470, 32
    %v1516 = vpop.permute.xlu0 %1515
    %1517 = vrot.lane.b32.xlu0 %v1493, 32
    %v1518 = vpop.permute.xlu0 %1517
    %v1519 = vsel %vm224, %v1512, %v1514
    %v1520 = vsel %vm224, %v1516, %v1518
    %v1523 = vmul.f32 %v1505, %v1519
    %v1524 = vmul.f32 %v1506, %v1520
    %v1526 = vsel %vm861, %v1523, 0
    %v1529 = vsel %vm861, %v1524, 0
    %1531 = vmatpush.msra.mxu0 0.0
    %1532 = vmatpush.msra.mxu0 0.0
    %1533 = vmatpush.msra.mxu0 0.0
    %1534 = vmatpush.msra.mxu0 0.0
    %1535 = vmatpush.msra.mxu0 %v920
    %1536 = vmatpush.msra.mxu0 %v919
    %1537 = vmatpush.msra.mxu0 %v918
    %1538 = vmatpush.msra.mxu0 %v917
    %1539 = vmatpush.msra.mxu0 %v916
    %1540 = vmatpush.msra.mxu0 %v915
    %1541 = vmatpush.msra.mxu0 %v914
    %1542 = vmatpush.msra.mxu0 %v913
    %1543 = vmatpush.msra.mxu0 %v912
    %1544 = vmatpush.msra.mxu0 %v911
    %1545 = vmatpush.msra.mxu0 %v910
    %1546 = vmatpush.msra.mxu0 %v909
    %1547 = vmatmul.f32.gmra.mxu0 %v1526
    %v1548 = vpop.f32.mrf.mxu0
    %v1549 = vadd.f32 0.0, %v1548
    %1550 = vmatmul.f32.gmra.mxu0 %v1529
    %v1551 = vpop.f32.mrf.mxu0
    %v1552 = vadd.f32 0.0, %v1551
    %1553 = vdwg.mxu0
    %v1554 = vadd.f32 %v1404, %v1549
    %v1555 = vadd.f32 %v1405, %v1552
    %v1557 = vrot.slane %v1554, 7
    %v1560 = vrot.slane %v1555, 6
    %vm1562 = vcmask 1040384
    %v1563 = vsel %vm1562, %v1557, %v1560
    %v1564 = vld [vmem:[%s2 + $0x1c4] sm:$0x1]
    %v1565 = vld [vmem:[#allocation2 + $0x180] sm:$0xff]
    %v1566 = vld [vmem:[#allocation2 + $0x188] sm:$0xff]
    %v1567 = vld [vmem:[#allocation2 + $0x190] sm:$0xff]
    %v1568 = vld [vmem:[#allocation2 + $0x198] sm:$0xff]
    %v1569 = vld [vmem:[#allocation2 + $0x1a0] sm:$0xff]
    %v1570 = vld [vmem:[#allocation2 + $0x1a8] sm:$0xff]
    %v1571 = vld [vmem:[#allocation2 + $0x1b0] sm:$0xff]
    %v1572 = vld [vmem:[#allocation2 + $0x1b8] sm:$0xff]
    %v1573 = vmul.f32 %v1563, %v1563
    %vm1574 = vcmask 254976
    %v1575 = vsel %vm1574, %v1573, 0.0
    %1576 = vadd.xlane.f32.xlu0 %v1575
    %v1577 = vpop.xlane.xlu0 %1576
    %v1578 = vmul.f32 %v1577, %v237
    %v1579 = vadd.f32 %v1578, 1e-05
    %v1580 = vrsqrt.pop %v1579
    %v1581 = vmul.f32 %v1580, %v1579
    %v1582 = vmul.f32 %v1581, %v1580
    %v1583 = vmul.f32 0.5, %v1582
    %v1584 = vsub.f32 1.5, %v1583
    %v1585 = vmul.f32 %v1580, %v1584
    %vm1586 = vweird.f32 %v1579
    %vm1587 = vweird.f32 %v1580
    %vm1588 = vmor %vm1586, %vm1587
    %v1589 = vsel %vm1588, %v1580, %v1585
    %v1590 = vmul.f32 %v1563, %v1589
    %v1591 = vperm.slane %v1564, 0
    %v1592 = vmul.f32 %v1590, %v1591
    %v1594 = vsel %vm224, %v1592, 0
    %1596 = vmatpush.msra.mxu0 0.0
    %1597 = vmatpush.msra.mxu0 0.0
    %1598 = vmatpush.msra.mxu0 0.0
    %1599 = vmatpush.msra.mxu0 0.0
    %1600 = vmatpush.msra.mxu0 0.0
    %1601 = vmatpush.msra.mxu0 0.0
    %1602 = vmatpush.msra.mxu0 0.0
    %1603 = vmatpush.msra.mxu0 0.0
    %1604 = vmatpush.msra.mxu0 0.0
    %1605 = vmatpush.msra.mxu0 0.0
    %1606 = vmatpush.msra.mxu0 0.0
    %1607 = vmatpush.msra.mxu0 0.0
    %1608 = vmatpush.msra.mxu0 %v1571
    %1609 = vmatpush.msra.mxu0 %v1569
    %1610 = vmatpush.msra.mxu0 %v1567
    %1611 = vmatpush.msra.mxu0 %v1565
    %1612 = vmatmul.f32.gmra.mxu0 %v1594
    %v1613 = vpop.f32.mrf.mxu0
    %v1614 = vadd.f32 0.0, %v1613
    %1615 = vdwg.mxu0
    %1616 = vmatpush.msra.mxu0 0.0
    %1617 = vmatpush.msra.mxu0 0.0
    %1618 = vmatpush.msra.mxu0 0.0
    %1619 = vmatpush.msra.mxu0 0.0
    %1620 = vmatpush.msra.mxu0 0.0
    %1621 = vmatpush.msra.mxu0 0.0
    %1622 = vmatpush.msra.mxu0 0.0
    %1623 = vmatpush.msra.mxu0 0.0
    %1624 = vmatpush.msra.mxu0 0.0
    %1625 = vmatpush.msra.mxu0 0.0
    %1626 = vmatpush.msra.mxu0 0.0
    %1627 = vmatpush.msra.mxu0 0.0
    %1628 = vmatpush.msra.mxu0 %v1572
    %1629 = vmatpush.msra.mxu0 %v1570
    %1630 = vmatpush.msra.mxu0 %v1568
    %1631 = vmatpush.msra.mxu0 %v1566
    %1632 = vmatmul.f32.gmra.mxu0 %v1594
    %v1633 = vpop.f32.mrf.mxu0
    %v1634 = vadd.f32 0.0, %v1633
    %1635 = vdwg.mxu0
    %v1638 = vrot.slane %v1634, 6
    %vm1639 = vcmask 1041408
    %v1640 = vsel %vm1639, %v1614, %v1638
    %1642 = vst [vmem:[%s4] sm:$0xf] %v1640
    // Predicated region
    $region22: #{llada_forward.1} parent=1 // pred_check
      _
    $region23: #{llada_forward.1} parent=1 // pred_check_branch
      %1644 = sbr.rel (0) target = $region25
    $region24: #{llada_forward.1} parent=1 // pred_region
      _
    $region25: #{llada_forward.1} parent=1 // pred_fallthru
      _
    // Predicated region
    $region26: #{llada_forward.1} parent=1 // pred_check
      _
    $region27: #{llada_forward.1} parent=1 // pred_check_branch
      %1646 = sbr.rel (0) target = $region29
    $region28: #{llada_forward.1} parent=1 // pred_region
      _
    $region29: #{llada_forward.1} parent=1 // pred_fallthru
      _
    %1647 = vsyncpa [#allocation3], 1

</llo_original>
